<compile_context>
chip_gen: v5e
topology: v5e:2x2
jax: 0.10.0
libtpu: 0.0.40
codegen_flags: <defaults>
</compile_context>

<pallas_src>
import functools

import jax
import jax.numpy as jnp
from jax.experimental import pallas as pl
from jax.experimental.pallas import tpu as pltpu


# ----------------------------------------------------------------------------
# Pallas kernels
# ----------------------------------------------------------------------------
def _ln_f32(y, g, b):
    mu = jnp.mean(y, axis=-1, keepdims=True)
    var = jnp.mean((y - mu) ** 2, axis=-1, keepdims=True)
    return (y - mu) * jax.lax.rsqrt(var + 1e-5) * g + b


def _linear_kernel(x_ref, w_ref, b_ref, o_ref):
    # y = x @ W + b ; W stored bf16, x cast to bf16, f32 accumulation on the MXU.
    o_ref[...] = (
        jnp.dot(x_ref[...].astype(jnp.bfloat16), w_ref[...],
                preferred_element_type=jnp.float32)
        + b_ref[...]
    )


def _proj_add_ln_kernel(x_ref, w_ref, b_ref, res_ref, g_ref, bt_ref, o_ref):
    # LayerNorm(res + x @ W + b)  — matmul with fused residual-add + LN epilogue.
    y = (jnp.dot(x_ref[...].astype(jnp.bfloat16), w_ref[...],
                 preferred_element_type=jnp.float32)
         + b_ref[...] + res_ref[...])
    o_ref[...] = _ln_f32(y, g_ref[...], bt_ref[...])


def _ffn_add_ln_kernel(x_ref, w1_ref, b1_ref, w2_ref, b2_ref, g_ref, bt_ref, o_ref):
    # LayerNorm(x + relu(x@W1 + b1) @ W2 + b2); [tm, dim_ff] intermediate stays in VMEM.
    x = x_ref[...]
    h = (jnp.dot(x.astype(jnp.bfloat16), w1_ref[...],
                 preferred_element_type=jnp.float32) + b1_ref[...])
    h = jnp.maximum(h, 0.0)
    y = (jnp.dot(h.astype(jnp.bfloat16), w2_ref[...],
                 preferred_element_type=jnp.float32) + b2_ref[...] + x)
    o_ref[...] = _ln_f32(y, g_ref[...], bt_ref[...])


def _layernorm_kernel(x_ref, g_ref, b_ref, o_ref):
    o_ref[...] = _ln_f32(x_ref[...], g_ref[...], b_ref[...])


def _attn_kernel(q_ref, k_ref, v_ref, am_ref, kpm_ref, o_ref):
    # One grid step = one batch element, all heads at once.
    # q/k/v blocks: [1, H, L, Dh]; am: [Lq, Lk] additive; kpm: [1, 1, Lk] additive.
    # 1/sqrt(Dh) scale is already folded into Wq.
    q = q_ref[0].astype(jnp.bfloat16)      # [H, Lq, Dh]
    k = k_ref[0].astype(jnp.bfloat16)      # [H, Lk, Dh]
    v = v_ref[0].astype(jnp.bfloat16)      # [H, Lk, Dh]
    # Batched over heads; contracts Dh so K is consumed in its stored layout (no k.T).
    s = jnp.einsum("hqd,hkd->hqk", q, k,
                   preferred_element_type=jnp.float32)          # [H, Lq, Lk] f32
    s = s + am_ref[...][None, :, :] + kpm_ref[0][None, :, :]    # masks added in f32
    s = s - jnp.max(s, axis=-1, keepdims=True)
    p = jnp.exp(s)
    p = p * pl.reciprocal(jnp.sum(p, axis=-1, keepdims=True), approx=True)
    o_ref[0] = jnp.einsum("hqk,hkd->hqd", p.astype(jnp.bfloat16), v,
                          preferred_element_type=jnp.float32)   # [H, Lq, Dh]


# ----------------------------------------------------------------------------
# Pallas wrappers
# ----------------------------------------------------------------------------
def _row_tile(n, cap=256):
    """Largest multiple-of-8 row tile <= cap that divides n (else full n)."""
    if n % 8 == 0:
        t = min((n // 8) * 8, (cap // 8) * 8)
        while t >= 8:
            if n % t == 0:
                return t
            t -= 8
    return n


_PAR = pltpu.CompilerParams(dimension_semantics=("parallel",))


def pallas_linear(x, w, b):
    # x: [N, Din] f32, w: [Din, Dout] bf16, b: [Dout] f32 -> [N, Dout] f32
    N, Din = x.shape
    Dout = w.shape[1]
    tm = _row_tile(N)
    return pl.pallas_call(
        _linear_kernel,
        out_shape=jax.ShapeDtypeStruct((N, Dout), jnp.float32),
        grid=(N // tm,),
        in_specs=[
            pl.BlockSpec((tm, Din), lambda i: (i, 0)),
            pl.BlockSpec((Din, Dout), lambda i: (0, 0)),
            pl.BlockSpec((1, Dout), lambda i: (0, 0)),
        ],
        out_specs=pl.BlockSpec((tm, Dout), lambda i: (i, 0)),
        compiler_params=_PAR,
    )(x, w, b.reshape(1, Dout))


def pallas_proj_add_ln(x, w, b, res, gamma, beta):
    # LayerNorm(res + x @ w + b)
    N, Din = x.shape
    Dout = w.shape[1]
    tm = _row_tile(N)
    return pl.pallas_call(
        _proj_add_ln_kernel,
        out_shape=jax.ShapeDtypeStruct((N, Dout), jnp.float32),
        grid=(N // tm,),
        in_specs=[
            pl.BlockSpec((tm, Din), lambda i: (i, 0)),
            pl.BlockSpec((Din, Dout), lambda i: (0, 0)),
            pl.BlockSpec((1, Dout), lambda i: (0, 0)),
            pl.BlockSpec((tm, Dout), lambda i: (i, 0)),
            pl.BlockSpec((1, Dout), lambda i: (0, 0)),
            pl.BlockSpec((1, Dout), lambda i: (0, 0)),
        ],
        out_specs=pl.BlockSpec((tm, Dout), lambda i: (i, 0)),
        compiler_params=_PAR,
    )(x, w, b.reshape(1, Dout), res, gamma.reshape(1, Dout), beta.reshape(1, Dout))


def pallas_ffn_add_ln(x, w1, b1, w2, b2, gamma, beta):
    # LayerNorm(x + relu(x@w1+b1)@w2 + b2)
    N, E = x.shape
    F = w1.shape[1]
    tm = _row_tile(N)
    return pl.pallas_call(
        _ffn_add_ln_kernel,
        out_shape=jax.ShapeDtypeStruct((N, E), jnp.float32),
        grid=(N // tm,),
        in_specs=[
            pl.BlockSpec((tm, E), lambda i: (i, 0)),
            pl.BlockSpec((E, F), lambda i: (0, 0)),
            pl.BlockSpec((1, F), lambda i: (0, 0)),
            pl.BlockSpec((F, E), lambda i: (0, 0)),
            pl.BlockSpec((1, E), lambda i: (0, 0)),
            pl.BlockSpec((1, E), lambda i: (0, 0)),
            pl.BlockSpec((1, E), lambda i: (0, 0)),
        ],
        out_specs=pl.BlockSpec((tm, E), lambda i: (i, 0)),
        compiler_params=_PAR,
    )(x, w1, b1.reshape(1, F), w2, b2.reshape(1, E),
      gamma.reshape(1, E), beta.reshape(1, E))


def pallas_layernorm(x, gamma, beta):
    N, D = x.shape
    tm = _row_tile(N)
    return pl.pallas_call(
        _layernorm_kernel,
        out_shape=jax.ShapeDtypeStruct((N, D), jnp.float32),
        grid=(N // tm,),
        in_specs=[
            pl.BlockSpec((tm, D), lambda i: (i, 0)),
            pl.BlockSpec((1, D), lambda i: (0, 0)),
            pl.BlockSpec((1, D), lambda i: (0, 0)),
        ],
        out_specs=pl.BlockSpec((tm, D), lambda i: (i, 0)),
        compiler_params=_PAR,
    )(x, gamma.reshape(1, D), beta.reshape(1, D))


def pallas_attention(q, k, v, attn_mask, kpm_add):
    # q: [B, H, Lq, Dh]; k/v: [B, H, Lk, Dh]; attn_mask: [Lq, Lk]; kpm_add: [B, 1, Lk]
    B, H, Lq, Dh = q.shape
    Lk = k.shape[2]
    return pl.pallas_call(
        _attn_kernel,
        out_shape=jax.ShapeDtypeStruct((B, H, Lq, Dh), jnp.float32),
        grid=(B,),
        in_specs=[
            pl.BlockSpec((1, H, Lq, Dh), lambda i: (i, 0, 0, 0)),
            pl.BlockSpec((1, H, Lk, Dh), lambda i: (i, 0, 0, 0)),
            pl.BlockSpec((1, H, Lk, Dh), lambda i: (i, 0, 0, 0)),
            pl.BlockSpec((Lq, Lk), lambda i: (0, 0)),
            pl.BlockSpec((1, 1, Lk), lambda i: (i, 0, 0)),
        ],
        out_specs=pl.BlockSpec((1, H, Lq, Dh), lambda i: (i, 0, 0, 0)),
        compiler_params=_PAR,
    )(q, k, v, attn_mask, kpm_add)


# ----------------------------------------------------------------------------
# Parameter init (weights stored bf16, biases/LN params f32)
# ----------------------------------------------------------------------------
def xavier_uniform(key, shape):
    fan_in, fan_out = shape[0], shape[1]
    limit = (6.0 / (fan_in + fan_out)) ** 0.5
    return jax.random.uniform(key, shape, jnp.float32, -limit, limit)


def init_mha(key, d_model, nhead):
    ks = jax.random.split(key, 4)
    dh = d_model // nhead
    scale = 1.0 / (dh ** 0.5)
    wq = xavier_uniform(ks[0], (d_model, d_model)) * scale  # fold 1/sqrt(Dh) into Wq
    wk = xavier_uniform(ks[1], (d_model, d_model))
    wv = xavier_uniform(ks[2], (d_model, d_model))
    wo = xavier_uniform(ks[3], (d_model, d_model))
    # q-bias would also be scaled; it is zero here so the fold is a no-op.
    return {
        "wqkv": jnp.concatenate([wq, wk, wv], axis=1).astype(jnp.bfloat16),
        "bqkv": jnp.zeros((3 * d_model,), jnp.float32),
        "wo": wo.astype(jnp.bfloat16),
        "bo": jnp.zeros((d_model,), jnp.float32),
    }


def init_ln(d_model):
    return {"g": jnp.ones((d_model,), jnp.float32),
            "b": jnp.zeros((d_model,), jnp.float32)}


def init_encoder_layer(key, d_model, nhead, dim_ff):
    ks = jax.random.split(key, 3)
    return {
        "self_attn": init_mha(ks[0], d_model, nhead),
        "w1": xavier_uniform(ks[1], (d_model, dim_ff)).astype(jnp.bfloat16),
        "b1": jnp.zeros((dim_ff,), jnp.float32),
        "w2": xavier_uniform(ks[2], (dim_ff, d_model)).astype(jnp.bfloat16),
        "b2": jnp.zeros((d_model,), jnp.float32),
        "norm1": init_ln(d_model),
        "norm2": init_ln(d_model),
    }


def init_decoder_layer(key, d_model, nhead, dim_ff):
    ks = jax.random.split(key, 4)
    return {
        "self_attn": init_mha(ks[0], d_model, nhead),
        "cross_attn": init_mha(ks[1], d_model, nhead),
        "w1": xavier_uniform(ks[2], (d_model, dim_ff)).astype(jnp.bfloat16),
        "b1": jnp.zeros((dim_ff,), jnp.float32),
        "w2": xavier_uniform(ks[3], (dim_ff, d_model)).astype(jnp.bfloat16),
        "b2": jnp.zeros((d_model,), jnp.float32),
        "norm1": init_ln(d_model),
        "norm2": init_ln(d_model),
        "norm3": init_ln(d_model),
    }


def init_transformer(key, d_model, nhead, n_enc, n_dec, dim_ff):
    keys = jax.random.split(key, n_enc + n_dec)
    return {
        "enc_layers": [init_encoder_layer(keys[i], d_model, nhead, dim_ff)
                       for i in range(n_enc)],
        "dec_layers": [init_decoder_layer(keys[n_enc + i], d_model, nhead, dim_ff)
                       for i in range(n_dec)],
        "enc_norm": init_ln(d_model),
        "dec_norm": init_ln(d_model),
    }


# ----------------------------------------------------------------------------
# Model glue (reshapes / mask prep in plain JAX, fused under jit)
# ----------------------------------------------------------------------------
def _prep_masks(attn_mask, key_padding_mask, B, Lq, Lk):
    if attn_mask is None:
        am = jnp.zeros((Lq, Lk), jnp.float32)
    else:
        am = attn_mask.astype(jnp.float32)
    if key_padding_mask is None:
        kpm = jnp.zeros((B, 1, Lk), jnp.float32)
    else:
        kpm = jnp.where(key_padding_mask, -1e9, 0.0).astype(jnp.float32).reshape(B, 1, Lk)
    return am, kpm


def mha_heads_self(p, x, nhead, attn_mask, key_padding_mask):
    # x: [L, B, E] -> concatenated head outputs [L*B, E] (pre output-projection)
    L, B, E = x.shape
    Dh = E // nhead
    qkv = pallas_linear(x.reshape(L * B, E), p["wqkv"], p["bqkv"])  # [L*B, 3E]
    qkv = qkv.reshape(L, B, 3, nhead, Dh)
    qkv = jnp.transpose(qkv, (2, 1, 3, 0, 4))                       # [3, B, H, L, Dh]
    q, k, v = qkv[0], qkv[1], qkv[2]
    am, kpm = _prep_masks(attn_mask, key_padding_mask, B, L, L)
    oh = pallas_attention(q, k, v, am, kpm)                         # [B, H, L, Dh]
    return jnp.transpose(oh, (2, 0, 1, 3)).reshape(L * B, E)


def mha_heads_cross(p, query, memory, nhead, attn_mask, key_padding_mask):
    Lq, B, E = query.shape
    Lk = memory.shape[0]
    Dh = E // nhead
    q = pallas_linear(query.reshape(Lq * B, E), p["wqkv"][:, :E], p["bqkv"][:E])
    kv = pallas_linear(memory.reshape(Lk * B, E), p["wqkv"][:, E:], p["bqkv"][E:])
    q = q.reshape(Lq, B, nhead, Dh).transpose(1, 2, 0, 3)           # [B, H, Lq, Dh]
    kv = kv.reshape(Lk, B, 2, nhead, Dh).transpose(2, 1, 3, 0, 4)   # [2, B, H, Lk, Dh]
    k, v = kv[0], kv[1]
    am, kpm = _prep_masks(attn_mask, key_padding_mask, B, Lq, Lk)
    oh = pallas_attention(q, k, v, am, kpm)                         # [B, H, Lq, Dh]
    return jnp.transpose(oh, (2, 0, 1, 3)).reshape(Lq * B, E)


def encoder_layer_fwd(p, src, nhead, src_mask=None, src_key_padding_mask=None):
    L, B, E = src.shape
    x_flat = src.reshape(L * B, E)
    heads = mha_heads_self(p["self_attn"], src, nhead, src_mask, src_key_padding_mask)
    x_flat = pallas_proj_add_ln(heads, p["self_attn"]["wo"], p["self_attn"]["bo"],
                                x_flat, p["norm1"]["g"], p["norm1"]["b"])
    x_flat = pallas_ffn_add_ln(x_flat, p["w1"], p["b1"], p["w2"], p["b2"],
                               p["norm2"]["g"], p["norm2"]["b"])
    return x_flat.reshape(L, B, E)


def decoder_layer_fwd(p, tgt, memory, nhead, tgt_mask=None, memory_mask=None,
                      tgt_key_padding_mask=None, memory_key_padding_mask=None):
    L, B, E = tgt.shape
    x_flat = tgt.reshape(L * B, E)
    heads = mha_heads_self(p["self_attn"], tgt, nhead, tgt_mask, tgt_key_padding_mask)
    x_flat = pallas_proj_add_ln(heads, p["self_attn"]["wo"], p["self_attn"]["bo"],
                                x_flat, p["norm1"]["g"], p["norm1"]["b"])
    tgt_ln = x_flat.reshape(L, B, E)
    heads = mha_heads_cross(p["cross_attn"], tgt_ln, memory, nhead,
                            memory_mask, memory_key_padding_mask)
    x_flat = pallas_proj_add_ln(heads, p["cross_attn"]["wo"], p["cross_attn"]["bo"],
                                x_flat, p["norm2"]["g"], p["norm2"]["b"])
    x_flat = pallas_ffn_add_ln(x_flat, p["w1"], p["b1"], p["w2"], p["b2"],
                               p["norm3"]["g"], p["norm3"]["b"])
    return x_flat.reshape(L, B, E)


@functools.partial(jax.jit, static_argnames=("nhead",))
def transformer_fwd(params, src, tgt, nhead, src_mask=None, tgt_mask=None,
                    memory_mask=None, src_key_padding_mask=None,
                    tgt_key_padding_mask=None, memory_key_padding_mask=None):
    # Encoder
    out = src
    for lp in params["enc_layers"]:
        out = encoder_layer_fwd(lp, out, nhead, src_mask, src_key_padding_mask)
    Ls, B, E = out.shape
    memory = pallas_layernorm(out.reshape(Ls * B, E),
                              params["enc_norm"]["g"],
                              params["enc_norm"]["b"]).reshape(Ls, B, E)
    # Decoder
    out = tgt
    for lp in params["dec_layers"]:
        out = decoder_layer_fwd(lp, out, memory, nhead, tgt_mask, memory_mask,
                                tgt_key_padding_mask, memory_key_padding_mask)
    Lt, B, E = out.shape
    out = pallas_layernorm(out.reshape(Lt * B, E),
                           params["dec_norm"]["g"],
                           params["dec_norm"]["b"]).reshape(Lt, B, E)
    return out


def generate_square_subsequent_mask(sz):
    # 0.0 on/below diagonal, large-negative above (≈ -inf additive mask)
    return jnp.triu(jnp.full((sz, sz), -1e9, jnp.float32), k=1)


# ----------------------------------------------------------------------------
# Demo
# ----------------------------------------------------------------------------
if __name__ == "__main__":
    d_model, nhead, dim_ff = 32, 4, 64
    num_enc, num_dec = 2, 2
    src_len, tgt_len, batch = 8, 8, 2

    key = jax.random.PRNGKey(0)
    k_params, k_src, k_tgt = jax.random.split(key, 3)

    params = init_transformer(k_params, d_model, nhead, num_enc, num_dec, dim_ff)
    src = jax.random.normal(k_src, (src_len, batch, d_model), jnp.float32)
    tgt = jax.random.normal(k_tgt, (tgt_len, batch, d_model), jnp.float32)
    tgt_mask = generate_square_subsequent_mask(tgt_len)

    out = transformer_fwd(params, src, tgt, nhead=nhead, tgt_mask=tgt_mask)
    out = jax.block_until_ready(out)
    assert out.shape == (tgt_len, batch, d_model)
    assert bool(jnp.all(jnp.isfinite(out)))
    print("KERNEL_OK")
</pallas_src>

<mosaic_0001>
module attributes {stable_mosaic.version = 11 : i64} {
  func.func @_linear_kernel(%arg0: i32, %arg1: memref<16x32xf32, #tpu.memory_space<vmem>>, %arg2: memref<32x96xbf16, #tpu.memory_space<vmem>>, %arg3: memref<1x96xf32, #tpu.memory_space<vmem>>, %arg4: memref<16x96xf32, #tpu.memory_space<vmem>>) attributes {dimension_semantics = [#tpu.dimension_semantics<parallel>], iteration_bounds = array<i64: 1>, scalar_prefetch = 0 : i64, scratch_operands = 0 : i64, tpu.core_type = #tpu.core_type<tc>, window_params = [{transform_indices = @transform_0, window_bounds = array<i64: 16, 32>}, {pipeline_mode = #tpu.pipeline_mode<synchronous>, transform_indices = @transform_1, window_bounds = array<i64: 32, 96>}, {pipeline_mode = #tpu.pipeline_mode<synchronous>, transform_indices = @transform_2, window_bounds = array<i64: 1, 96>}, {transform_indices = @transform_3, window_bounds = array<i64: 16, 96>}]} {
    %c0 = arith.constant 0 : index
    %c0_0 = arith.constant 0 : index
    %0 = vector.load %arg1[%c0, %c0_0] : memref<16x32xf32, #tpu.memory_space<vmem>>, vector<16x32xf32>
    %1 = arith.truncf %0 : vector<16x32xf32> to vector<16x32xbf16>
    %c0_1 = arith.constant 0 : index
    %c0_2 = arith.constant 0 : index
    %2 = vector.load %arg2[%c0_1, %c0_2] : memref<32x96xbf16, #tpu.memory_space<vmem>>, vector<32x96xbf16>
    %cst = arith.constant dense<0.000000e+00> : vector<16x96xf32>
    %3 = tpu.matmul %1, %2, %cst {dimension_numbers = #tpu.dot_dimension_numbers<[1], [0], [0], [1], [0, 0, 1, 1], [], []>} : vector<16x32xbf16>, vector<32x96xbf16>, vector<16x96xf32> -> vector<16x96xf32>
    %c0_3 = arith.constant 0 : index
    %c0_4 = arith.constant 0 : index
    %4 = vector.load %arg3[%c0_3, %c0_4] : memref<1x96xf32, #tpu.memory_space<vmem>>, vector<1x96xf32>
    %5 = vector.broadcast %4 : vector<1x96xf32> to vector<16x96xf32>
    %6 = arith.addf %3, %5 : vector<16x96xf32>
    %c0_5 = arith.constant 0 : index
    %c0_6 = arith.constant 0 : index
    %7 = vector.load %arg4[%c0_5, %c0_6] : memref<16x96xf32, #tpu.memory_space<vmem>>, vector<16x96xf32>
    tpu.vector_store %arg4[%c0_5, %c0_6], %6 {strides = array<i32>} : memref<16x96xf32, #tpu.memory_space<vmem>>, vector<16x96xf32>,
    return
  }
  func.func @transform_0(%arg0: i32) -> (i32, i32) {
    %c0_i32 = arith.constant 0 : i32
    %c0_i32_0 = arith.constant 0 : i32
    return %arg0, %c0_i32 : i32, i32
  }
  func.func @transform_1(%arg0: i32) -> (i32, i32) {
    %c0_i32 = arith.constant 0 : i32
    %c0_i32_0 = arith.constant 0 : i32
    %c0_i32_1 = arith.constant 0 : i32
    return %c0_i32, %c0_i32_0 : i32, i32
  }
  func.func @transform_2(%arg0: i32) -> (i32, i32) {
    %c0_i32 = arith.constant 0 : i32
    %c0_i32_0 = arith.constant 0 : i32
    %c0_i32_1 = arith.constant 0 : i32
    return %c0_i32, %c0_i32_0 : i32, i32
  }
  func.func @transform_3(%arg0: i32) -> (i32, i32) {
    %c0_i32 = arith.constant 0 : i32
    %c0_i32_0 = arith.constant 0 : i32
    return %arg0, %c0_i32 : i32, i32
  }
}

module attributes {stable_mosaic.version = 11 : i64} {
  func.func @_attn_kernel(%arg0: i32, %arg1: memref<1x4x8x8xf32, #tpu.memory_space<vmem>>, %arg2: memref<1x4x8x8xf32, #tpu.memory_space<vmem>>, %arg3: memref<1x4x8x8xf32, #tpu.memory_space<vmem>>, %arg4: memref<8x8xf32, #tpu.memory_space<vmem>>, %arg5: memref<1x1x8xf32, #tpu.memory_space<vmem>>, %arg6: memref<1x4x8x8xf32, #tpu.memory_space<vmem>>) attributes {dimension_semantics = [#tpu.dimension_semantics<parallel>], iteration_bounds = array<i64: 2>, scalar_prefetch = 0 : i64, scratch_operands = 0 : i64, tpu.core_type = #tpu.core_type<tc>, window_params = [{transform_indices = @transform_0, window_bounds = array<i64: 1, 4, 8, 8>}, {transform_indices = @transform_1, window_bounds = array<i64: 1, 4, 8, 8>}, {transform_indices = @transform_2, window_bounds = array<i64: 1, 4, 8, 8>}, {pipeline_mode = #tpu.pipeline_mode<synchronous>, transform_indices = @transform_3, window_bounds = array<i64: 8, 8>}, {transform_indices = @transform_4, window_bounds = array<i64: 1, 1, 8>}, {transform_indices = @transform_5, window_bounds = array<i64: 1, 4, 8, 8>}]} {
    %c0 = arith.constant 0 : index
    %c0_0 = arith.constant 0 : index
    %c0_1 = arith.constant 0 : index
    %c0_2 = arith.constant 0 : index
    %0 = vector.load %arg1[%c0, %c0_0, %c0_1, %c0_2] : memref<1x4x8x8xf32, #tpu.memory_space<vmem>>, vector<1x4x8x8xf32>
    %1 = vector.shape_cast %0 : vector<1x4x8x8xf32> to vector<4x8x8xf32>
    %2 = arith.truncf %1 : vector<4x8x8xf32> to vector<4x8x8xbf16>
    %c0_3 = arith.constant 0 : index
    %c0_4 = arith.constant 0 : index
    %c0_5 = arith.constant 0 : index
    %c0_6 = arith.constant 0 : index
    %3 = vector.load %arg2[%c0_3, %c0_4, %c0_5, %c0_6] : memref<1x4x8x8xf32, #tpu.memory_space<vmem>>, vector<1x4x8x8xf32>
    %4 = vector.shape_cast %3 : vector<1x4x8x8xf32> to vector<4x8x8xf32>
    %5 = arith.truncf %4 : vector<4x8x8xf32> to vector<4x8x8xbf16>
    %c0_7 = arith.constant 0 : index
    %c0_8 = arith.constant 0 : index
    %c0_9 = arith.constant 0 : index
    %c0_10 = arith.constant 0 : index
    %6 = vector.load %arg3[%c0_7, %c0_8, %c0_9, %c0_10] : memref<1x4x8x8xf32, #tpu.memory_space<vmem>>, vector<1x4x8x8xf32>
    %7 = vector.shape_cast %6 : vector<1x4x8x8xf32> to vector<4x8x8xf32>
    %8 = arith.truncf %7 : vector<4x8x8xf32> to vector<4x8x8xbf16>
    "tpu.trace_start"() <{level = 10 : i32, message = "hqd,hkd->hqk"}> : () -> ()
    %cst = arith.constant dense<0.000000e+00> : vector<4x8x8xf32>
    %9 = tpu.matmul %2, %5, %cst {dimension_numbers = #tpu.dot_dimension_numbers<[2], [2], [1], [1], [0, 0, 0, 1, 1, 1], [0], [0]>} : vector<4x8x8xbf16>, vector<4x8x8xbf16>, vector<4x8x8xf32> -> vector<4x8x8xf32>
    "tpu.trace_stop"() : () -> ()
    %c0_11 = arith.constant 0 : index
    %c0_12 = arith.constant 0 : index
    %10 = vector.load %arg4[%c0_11, %c0_12] : memref<8x8xf32, #tpu.memory_space<vmem>>, vector<8x8xf32>
    %11 = vector.shape_cast %10 : vector<8x8xf32> to vector<1x8x8xf32>
    %12 = vector.broadcast %11 : vector<1x8x8xf32> to vector<4x8x8xf32>
    %13 = arith.addf %9, %12 : vector<4x8x8xf32>
    %c0_13 = arith.constant 0 : index
    %c0_14 = arith.constant 0 : index
    %c0_15 = arith.constant 0 : index
    %14 = vector.load %arg5[%c0_13, %c0_14, %c0_15] : memref<1x1x8xf32, #tpu.memory_space<vmem>>, vector<1x1x8xf32>
    %15 = vector.shape_cast %14 : vector<1x1x8xf32> to vector<1x8xf32>
    %16 = vector.shape_cast %15 : vector<1x8xf32> to vector<1x1x8xf32>
    %17 = vector.broadcast %16 : vector<1x1x8xf32> to vector<4x8x8xf32>
    %18 = arith.addf %13, %17 : vector<4x8x8xf32>
    %cst_16 = arith.constant dense<0xFF800000> : vector<4x8xf32>
    %19 = vector.multi_reduction <maximumf>, %18, %cst_16 [2] : vector<4x8x8xf32> to vector<4x8xf32>
    %20 = vector.shape_cast %19 : vector<4x8xf32> to vector<4x8x1xf32>
    %21 = vector.broadcast %20 : vector<4x8x1xf32> to vector<4x8x8xf32>
    %22 = arith.subf %18, %21 : vector<4x8x8xf32>
    %23 = math.exp %22 : vector<4x8x8xf32>
    %cst_17 = arith.constant dense<0.000000e+00> : vector<4x8xf32>
    %24 = vector.multi_reduction <add>, %23, %cst_17 [2] : vector<4x8x8xf32> to vector<4x8xf32>
    %25 = vector.shape_cast %24 : vector<4x8xf32> to vector<4x8x1xf32>
    %26 = tpu.reciprocal %25 {approx = true} : vector<4x8x1xf32> -> vector<4x8x1xf32>
    %27 = vector.broadcast %26 : vector<4x8x1xf32> to vector<4x8x8xf32>
    %28 = arith.mulf %23, %27 : vector<4x8x8xf32>
    %29 = arith.truncf %28 : vector<4x8x8xf32> to vector<4x8x8xbf16>
    "tpu.trace_start"() <{level = 10 : i32, message = "hqk,hkd->hqd"}> : () -> ()
    %cst_18 = arith.constant dense<0.000000e+00> : vector<4x8x8xf32>
    %30 = tpu.matmul %29, %8, %cst_18 {dimension_numbers = #tpu.dot_dimension_numbers<[2], [1], [1], [2], [0, 0, 0, 1, 1, 2], [0], [0]>} : vector<4x8x8xbf16>, vector<4x8x8xbf16>, vector<4x8x8xf32> -> vector<4x8x8xf32>
    "tpu.trace_stop"() : () -> ()
    %c0_19 = arith.constant 0 : index
    %c0_20 = arith.constant 0 : index
    %c0_21 = arith.constant 0 : index
    %c0_22 = arith.constant 0 : index
    %31 = vector.load %arg6[%c0_19, %c0_20, %c0_21, %c0_22] : memref<1x4x8x8xf32, #tpu.memory_space<vmem>>, vector<1x4x8x8xf32>
    %32 = vector.shape_cast %31 : vector<1x4x8x8xf32> to vector<4x8x8xf32>
    %33 = vector.shape_cast %30 : vector<4x8x8xf32> to vector<1x4x8x8xf32>
    tpu.vector_store %arg6[%c0_19, %c0_20, %c0_21, %c0_22], %33 {strides = array<i32>} : memref<1x4x8x8xf32, #tpu.memory_space<vmem>>, vector<1x4x8x8xf32>,
    return
  }
  func.func @transform_0(%arg0: i32) -> (i32, i32, i32, i32) {
    %c0_i32 = arith.constant 0 : i32
    %c0_i32_0 = arith.constant 0 : i32
    %c0_i32_1 = arith.constant 0 : i32
    %c0_i32_2 = arith.constant 0 : i32
    return %arg0, %c0_i32, %c0_i32_0, %c0_i32_1 : i32, i32, i32, i32
  }
  func.func @transform_1(%arg0: i32) -> (i32, i32, i32, i32) {
    %c0_i32 = arith.constant 0 : i32
    %c0_i32_0 = arith.constant 0 : i32
    %c0_i32_1 = arith.constant 0 : i32
    %c0_i32_2 = arith.constant 0 : i32
    return %arg0, %c0_i32, %c0_i32_0, %c0_i32_1 : i32, i32, i32, i32
  }
  func.func @transform_2(%arg0: i32) -> (i32, i32, i32, i32) {
    %c0_i32 = arith.constant 0 : i32
    %c0_i32_0 = arith.constant 0 : i32
    %c0_i32_1 = arith.constant 0 : i32
    %c0_i32_2 = arith.constant 0 : i32
    return %arg0, %c0_i32, %c0_i32_0, %c0_i32_1 : i32, i32, i32, i32
  }
  func.func @transform_3(%arg0: i32) -> (i32, i32) {
    %c0_i32 = arith.constant 0 : i32
    %c0_i32_0 = arith.constant 0 : i32
    %c0_i32_1 = arith.constant 0 : i32
    return %c0_i32, %c0_i32_0 : i32, i32
  }
  func.func @transform_4(%arg0: i32) -> (i32, i32, i32) {
    %c0_i32 = arith.constant 0 : i32
    %c0_i32_0 = arith.constant 0 : i32
    %c0_i32_1 = arith.constant 0 : i32
    return %arg0, %c0_i32, %c0_i32_0 : i32, i32, i32
  }
  func.func @transform_5(%arg0: i32) -> (i32, i32, i32, i32) {
    %c0_i32 = arith.constant 0 : i32
    %c0_i32_0 = arith.constant 0 : i32
    %c0_i32_1 = arith.constant 0 : i32
    %c0_i32_2 = arith.constant 0 : i32
    return %arg0, %c0_i32, %c0_i32_0, %c0_i32_1 : i32, i32, i32, i32
  }
}

module attributes {stable_mosaic.version = 11 : i64} {
  func.func @_proj_add_ln_kernel(%arg0: i32, %arg1: memref<16x32xf32, #tpu.memory_space<vmem>>, %arg2: memref<32x32xbf16, #tpu.memory_space<vmem>>, %arg3: memref<1x32xf32, #tpu.memory_space<vmem>>, %arg4: memref<16x32xf32, #tpu.memory_space<vmem>>, %arg5: memref<1x32xf32, #tpu.memory_space<vmem>>, %arg6: memref<1x32xf32, #tpu.memory_space<vmem>>, %arg7: memref<16x32xf32, #tpu.memory_space<vmem>>) attributes {dimension_semantics = [#tpu.dimension_semantics<parallel>], iteration_bounds = array<i64: 1>, scalar_prefetch = 0 : i64, scratch_operands = 0 : i64, tpu.core_type = #tpu.core_type<tc>, window_params = [{transform_indices = @transform_0, window_bounds = array<i64: 16, 32>}, {pipeline_mode = #tpu.pipeline_mode<synchronous>, transform_indices = @transform_1, window_bounds = array<i64: 32, 32>}, {pipeline_mode = #tpu.pipeline_mode<synchronous>, transform_indices = @transform_2, window_bounds = array<i64: 1, 32>}, {transform_indices = @transform_3, window_bounds = array<i64: 16, 32>}, {pipeline_mode = #tpu.pipeline_mode<synchronous>, transform_indices = @transform_4, window_bounds = array<i64: 1, 32>}, {pipeline_mode = #tpu.pipeline_mode<synchronous>, transform_indices = @transform_5, window_bounds = array<i64: 1, 32>}, {transform_indices = @transform_6, window_bounds = array<i64: 16, 32>}]} {
    %c0 = arith.constant 0 : index
    %c0_0 = arith.constant 0 : index
    %0 = vector.load %arg1[%c0, %c0_0] : memref<16x32xf32, #tpu.memory_space<vmem>>, vector<16x32xf32>
    %1 = arith.truncf %0 : vector<16x32xf32> to vector<16x32xbf16>
    %c0_1 = arith.constant 0 : index
    %c0_2 = arith.constant 0 : index
    %2 = vector.load %arg2[%c0_1, %c0_2] : memref<32x32xbf16, #tpu.memory_space<vmem>>, vector<32x32xbf16>
    %cst = arith.constant dense<0.000000e+00> : vector<16x32xf32>
    %3 = tpu.matmul %1, %2, %cst {dimension_numbers = #tpu.dot_dimension_numbers<[1], [0], [0], [1], [0, 0, 1, 1], [], []>} : vector<16x32xbf16>, vector<32x32xbf16>, vector<16x32xf32> -> vector<16x32xf32>
    %c0_3 = arith.constant 0 : index
    %c0_4 = arith.constant 0 : index
    %4 = vector.load %arg3[%c0_3, %c0_4] : memref<1x32xf32, #tpu.memory_space<vmem>>, vector<1x32xf32>
    %5 = vector.broadcast %4 : vector<1x32xf32> to vector<16x32xf32>
    %6 = arith.addf %3, %5 : vector<16x32xf32>
    %c0_5 = arith.constant 0 : index
    %c0_6 = arith.constant 0 : index
    %7 = vector.load %arg4[%c0_5, %c0_6] : memref<16x32xf32, #tpu.memory_space<vmem>>, vector<16x32xf32>
    %8 = arith.addf %6, %7 : vector<16x32xf32>
    %c0_7 = arith.constant 0 : index
    %c0_8 = arith.constant 0 : index
    %9 = vector.load %arg5[%c0_7, %c0_8] : memref<1x32xf32, #tpu.memory_space<vmem>>, vector<1x32xf32>
    %c0_9 = arith.constant 0 : index
    %c0_10 = arith.constant 0 : index
    %10 = vector.load %arg6[%c0_9, %c0_10] : memref<1x32xf32, #tpu.memory_space<vmem>>, vector<1x32xf32>
    %cst_11 = arith.constant dense<0.000000e+00> : vector<16xf32>
    %11 = vector.multi_reduction <add>, %8, %cst_11 [1] : vector<16x32xf32> to vector<16xf32>
    %12 = vector.shape_cast %11 : vector<16xf32> to vector<16x1xf32>
    %cst_12 = arith.constant 3.200000e+01 : f32
    %13 = vector.broadcast %cst_12 : f32 to vector<16x1xf32>
    %14 = arith.divf %12, %13 : vector<16x1xf32>
    %15 = vector.broadcast %14 : vector<16x1xf32> to vector<16x32xf32>
    %16 = arith.subf %8, %15 : vector<16x32xf32>
    %17 = arith.mulf %16, %16 : vector<16x32xf32>
    %cst_13 = arith.constant dense<0.000000e+00> : vector<16xf32>
    %18 = vector.multi_reduction <add>, %17, %cst_13 [1] : vector<16x32xf32> to vector<16xf32>
    %19 = vector.shape_cast %18 : vector<16xf32> to vector<16x1xf32>
    %cst_14 = arith.constant 3.200000e+01 : f32
    %20 = vector.broadcast %cst_14 : f32 to vector<16x1xf32>
    %21 = arith.divf %19, %20 : vector<16x1xf32>
    %22 = vector.broadcast %14 : vector<16x1xf32> to vector<16x32xf32>
    %23 = arith.subf %8, %22 : vector<16x32xf32>
    %cst_15 = arith.constant 9.99999974E-6 : f32
    %24 = vector.broadcast %cst_15 : f32 to vector<16x1xf32>
    %25 = arith.addf %21, %24 : vector<16x1xf32>
    %26 = math.rsqrt %25 : vector<16x1xf32>
    %27 = vector.broadcast %26 : vector<16x1xf32> to vector<16x32xf32>
    %28 = arith.mulf %23, %27 : vector<16x32xf32>
    %29 = vector.broadcast %9 : vector<1x32xf32> to vector<16x32xf32>
    %30 = arith.mulf %28, %29 : vector<16x32xf32>
    %31 = vector.broadcast %10 : vector<1x32xf32> to vector<16x32xf32>
    %32 = arith.addf %30, %31 : vector<16x32xf32>
    %c0_16 = arith.constant 0 : index
    %c0_17 = arith.constant 0 : index
    %33 = vector.load %arg7[%c0_16, %c0_17] : memref<16x32xf32, #tpu.memory_space<vmem>>, vector<16x32xf32>
    tpu.vector_store %arg7[%c0_16, %c0_17], %32 {strides = array<i32>} : memref<16x32xf32, #tpu.memory_space<vmem>>, vector<16x32xf32>,
    return
  }
  func.func @transform_0(%arg0: i32) -> (i32, i32) {
    %c0_i32 = arith.constant 0 : i32
    %c0_i32_0 = arith.constant 0 : i32
    return %arg0, %c0_i32 : i32, i32
  }
  func.func @transform_1(%arg0: i32) -> (i32, i32) {
    %c0_i32 = arith.constant 0 : i32
    %c0_i32_0 = arith.constant 0 : i32
    %c0_i32_1 = arith.constant 0 : i32
    return %c0_i32, %c0_i32_0 : i32, i32
  }
  func.func @transform_2(%arg0: i32) -> (i32, i32) {
    %c0_i32 = arith.constant 0 : i32
    %c0_i32_0 = arith.constant 0 : i32
    %c0_i32_1 = arith.constant 0 : i32
    return %c0_i32, %c0_i32_0 : i32, i32
  }
  func.func @transform_3(%arg0: i32) -> (i32, i32) {
    %c0_i32 = arith.constant 0 : i32
    %c0_i32_0 = arith.constant 0 : i32
    return %arg0, %c0_i32 : i32, i32
  }
  func.func @transform_4(%arg0: i32) -> (i32, i32) {
    %c0_i32 = arith.constant 0 : i32
    %c0_i32_0 = arith.constant 0 : i32
    %c0_i32_1 = arith.constant 0 : i32
    return %c0_i32, %c0_i32_0 : i32, i32
  }
  func.func @transform_5(%arg0: i32) -> (i32, i32) {
    %c0_i32 = arith.constant 0 : i32
    %c0_i32_0 = arith.constant 0 : i32
    %c0_i32_1 = arith.constant 0 : i32
    return %c0_i32, %c0_i32_0 : i32, i32
  }
  func.func @transform_6(%arg0: i32) -> (i32, i32) {
    %c0_i32 = arith.constant 0 : i32
    %c0_i32_0 = arith.constant 0 : i32
    return %arg0, %c0_i32 : i32, i32
  }
}

module attributes {stable_mosaic.version = 11 : i64} {
  func.func @_linear_kernel(%arg0: i32, %arg1: memref<16x32xf32, #tpu.memory_space<vmem>>, %arg2: memref<32x32xbf16, #tpu.memory_space<vmem>>, %arg3: memref<1x32xf32, #tpu.memory_space<vmem>>, %arg4: memref<16x32xf32, #tpu.memory_space<vmem>>) attributes {dimension_semantics = [#tpu.dimension_semantics<parallel>], iteration_bounds = array<i64: 1>, scalar_prefetch = 0 : i64, scratch_operands = 0 : i64, tpu.core_type = #tpu.core_type<tc>, window_params = [{transform_indices = @transform_0, window_bounds = array<i64: 16, 32>}, {pipeline_mode = #tpu.pipeline_mode<synchronous>, transform_indices = @transform_1, window_bounds = array<i64: 32, 32>}, {pipeline_mode = #tpu.pipeline_mode<synchronous>, transform_indices = @transform_2, window_bounds = array<i64: 1, 32>}, {transform_indices = @transform_3, window_bounds = array<i64: 16, 32>}]} {
    %c0 = arith.constant 0 : index
    %c0_0 = arith.constant 0 : index
    %0 = vector.load %arg1[%c0, %c0_0] : memref<16x32xf32, #tpu.memory_space<vmem>>, vector<16x32xf32>
    %1 = arith.truncf %0 : vector<16x32xf32> to vector<16x32xbf16>
    %c0_1 = arith.constant 0 : index
    %c0_2 = arith.constant 0 : index
    %2 = vector.load %arg2[%c0_1, %c0_2] : memref<32x32xbf16, #tpu.memory_space<vmem>>, vector<32x32xbf16>
    %cst = arith.constant dense<0.000000e+00> : vector<16x32xf32>
    %3 = tpu.matmul %1, %2, %cst {dimension_numbers = #tpu.dot_dimension_numbers<[1], [0], [0], [1], [0, 0, 1, 1], [], []>} : vector<16x32xbf16>, vector<32x32xbf16>, vector<16x32xf32> -> vector<16x32xf32>
    %c0_3 = arith.constant 0 : index
    %c0_4 = arith.constant 0 : index
    %4 = vector.load %arg3[%c0_3, %c0_4] : memref<1x32xf32, #tpu.memory_space<vmem>>, vector<1x32xf32>
    %5 = vector.broadcast %4 : vector<1x32xf32> to vector<16x32xf32>
    %6 = arith.addf %3, %5 : vector<16x32xf32>
    %c0_5 = arith.constant 0 : index
    %c0_6 = arith.constant 0 : index
    %7 = vector.load %arg4[%c0_5, %c0_6] : memref<16x32xf32, #tpu.memory_space<vmem>>, vector<16x32xf32>
    tpu.vector_store %arg4[%c0_5, %c0_6], %6 {strides = array<i32>} : memref<16x32xf32, #tpu.memory_space<vmem>>, vector<16x32xf32>,
    return
  }
  func.func @transform_0(%arg0: i32) -> (i32, i32) {
    %c0_i32 = arith.constant 0 : i32
    %c0_i32_0 = arith.constant 0 : i32
    return %arg0, %c0_i32 : i32, i32
  }
  func.func @transform_1(%arg0: i32) -> (i32, i32) {
    %c0_i32 = arith.constant 0 : i32
    %c0_i32_0 = arith.constant 0 : i32
    %c0_i32_1 = arith.constant 0 : i32
    return %c0_i32, %c0_i32_0 : i32, i32
  }
  func.func @transform_2(%arg0: i32) -> (i32, i32) {
    %c0_i32 = arith.constant 0 : i32
    %c0_i32_0 = arith.constant 0 : i32
    %c0_i32_1 = arith.constant 0 : i32
    return %c0_i32, %c0_i32_0 : i32, i32
  }
  func.func @transform_3(%arg0: i32) -> (i32, i32) {
    %c0_i32 = arith.constant 0 : i32
    %c0_i32_0 = arith.constant 0 : i32
    return %arg0, %c0_i32 : i32, i32
  }
}

module attributes {stable_mosaic.version = 11 : i64} {
  func.func @_layernorm_kernel(%arg0: i32, %arg1: memref<16x32xf32, #tpu.memory_space<vmem>>, %arg2: memref<1x32xf32, #tpu.memory_space<vmem>>, %arg3: memref<1x32xf32, #tpu.memory_space<vmem>>, %arg4: memref<16x32xf32, #tpu.memory_space<vmem>>) attributes {dimension_semantics = [#tpu.dimension_semantics<parallel>], iteration_bounds = array<i64: 1>, scalar_prefetch = 0 : i64, scratch_operands = 0 : i64, tpu.core_type = #tpu.core_type<tc>, window_params = [{transform_indices = @transform_0, window_bounds = array<i64: 16, 32>}, {pipeline_mode = #tpu.pipeline_mode<synchronous>, transform_indices = @transform_1, window_bounds = array<i64: 1, 32>}, {pipeline_mode = #tpu.pipeline_mode<synchronous>, transform_indices = @transform_2, window_bounds = array<i64: 1, 32>}, {transform_indices = @transform_3, window_bounds = array<i64: 16, 32>}]} {
    %c0 = arith.constant 0 : index
    %c0_0 = arith.constant 0 : index
    %0 = vector.load %arg1[%c0, %c0_0] : memref<16x32xf32, #tpu.memory_space<vmem>>, vector<16x32xf32>
    %c0_1 = arith.constant 0 : index
    %c0_2 = arith.constant 0 : index
    %1 = vector.load %arg2[%c0_1, %c0_2] : memref<1x32xf32, #tpu.memory_space<vmem>>, vector<1x32xf32>
    %c0_3 = arith.constant 0 : index
    %c0_4 = arith.constant 0 : index
    %2 = vector.load %arg3[%c0_3, %c0_4] : memref<1x32xf32, #tpu.memory_space<vmem>>, vector<1x32xf32>
    %cst = arith.constant dense<0.000000e+00> : vector<16xf32>
    %3 = vector.multi_reduction <add>, %0, %cst [1] : vector<16x32xf32> to vector<16xf32>
    %4 = vector.shape_cast %3 : vector<16xf32> to vector<16x1xf32>
    %cst_5 = arith.constant 3.200000e+01 : f32
    %5 = vector.broadcast %cst_5 : f32 to vector<16x1xf32>
    %6 = arith.divf %4, %5 : vector<16x1xf32>
    %7 = vector.broadcast %6 : vector<16x1xf32> to vector<16x32xf32>
    %8 = arith.subf %0, %7 : vector<16x32xf32>
    %9 = arith.mulf %8, %8 : vector<16x32xf32>
    %cst_6 = arith.constant dense<0.000000e+00> : vector<16xf32>
    %10 = vector.multi_reduction <add>, %9, %cst_6 [1] : vector<16x32xf32> to vector<16xf32>
    %11 = vector.shape_cast %10 : vector<16xf32> to vector<16x1xf32>
    %cst_7 = arith.constant 3.200000e+01 : f32
    %12 = vector.broadcast %cst_7 : f32 to vector<16x1xf32>
    %13 = arith.divf %11, %12 : vector<16x1xf32>
    %14 = vector.broadcast %6 : vector<16x1xf32> to vector<16x32xf32>
    %15 = arith.subf %0, %14 : vector<16x32xf32>
    %cst_8 = arith.constant 9.99999974E-6 : f32
    %16 = vector.broadcast %cst_8 : f32 to vector<16x1xf32>
    %17 = arith.addf %13, %16 : vector<16x1xf32>
    %18 = math.rsqrt %17 : vector<16x1xf32>
    %19 = vector.broadcast %18 : vector<16x1xf32> to vector<16x32xf32>
    %20 = arith.mulf %15, %19 : vector<16x32xf32>
    %21 = vector.broadcast %1 : vector<1x32xf32> to vector<16x32xf32>
    %22 = arith.mulf %20, %21 : vector<16x32xf32>
    %23 = vector.broadcast %2 : vector<1x32xf32> to vector<16x32xf32>
    %24 = arith.addf %22, %23 : vector<16x32xf32>
    %c0_9 = arith.constant 0 : index
    %c0_10 = arith.constant 0 : index
    %25 = vector.load %arg4[%c0_9, %c0_10] : memref<16x32xf32, #tpu.memory_space<vmem>>, vector<16x32xf32>
    tpu.vector_store %arg4[%c0_9, %c0_10], %24 {strides = array<i32>} : memref<16x32xf32, #tpu.memory_space<vmem>>, vector<16x32xf32>,
    return
  }
  func.func @transform_0(%arg0: i32) -> (i32, i32) {
    %c0_i32 = arith.constant 0 : i32
    %c0_i32_0 = arith.constant 0 : i32
    return %arg0, %c0_i32 : i32, i32
  }
  func.func @transform_1(%arg0: i32) -> (i32, i32) {
    %c0_i32 = arith.constant 0 : i32
    %c0_i32_0 = arith.constant 0 : i32
    %c0_i32_1 = arith.constant 0 : i32
    return %c0_i32, %c0_i32_0 : i32, i32
  }
  func.func @transform_2(%arg0: i32) -> (i32, i32) {
    %c0_i32 = arith.constant 0 : i32
    %c0_i32_0 = arith.constant 0 : i32
    %c0_i32_1 = arith.constant 0 : i32
    return %c0_i32, %c0_i32_0 : i32, i32
  }
  func.func @transform_3(%arg0: i32) -> (i32, i32) {
    %c0_i32 = arith.constant 0 : i32
    %c0_i32_0 = arith.constant 0 : i32
    return %arg0, %c0_i32 : i32, i32
  }
}

module attributes {stable_mosaic.version = 11 : i64} {
  func.func @_linear_kernel(%arg0: i32, %arg1: memref<16x32xf32, #tpu.memory_space<vmem>>, %arg2: memref<32x64xbf16, #tpu.memory_space<vmem>>, %arg3: memref<1x64xf32, #tpu.memory_space<vmem>>, %arg4: memref<16x64xf32, #tpu.memory_space<vmem>>) attributes {dimension_semantics = [#tpu.dimension_semantics<parallel>], iteration_bounds = array<i64: 1>, scalar_prefetch = 0 : i64, scratch_operands = 0 : i64, tpu.core_type = #tpu.core_type<tc>, window_params = [{transform_indices = @transform_0, window_bounds = array<i64: 16, 32>}, {pipeline_mode = #tpu.pipeline_mode<synchronous>, transform_indices = @transform_1, window_bounds = array<i64: 32, 64>}, {pipeline_mode = #tpu.pipeline_mode<synchronous>, transform_indices = @transform_2, window_bounds = array<i64: 1, 64>}, {transform_indices = @transform_3, window_bounds = array<i64: 16, 64>}]} {
    %c0 = arith.constant 0 : index
    %c0_0 = arith.constant 0 : index
    %0 = vector.load %arg1[%c0, %c0_0] : memref<16x32xf32, #tpu.memory_space<vmem>>, vector<16x32xf32>
    %1 = arith.truncf %0 : vector<16x32xf32> to vector<16x32xbf16>
    %c0_1 = arith.constant 0 : index
    %c0_2 = arith.constant 0 : index
    %2 = vector.load %arg2[%c0_1, %c0_2] : memref<32x64xbf16, #tpu.memory_space<vmem>>, vector<32x64xbf16>
    %cst = arith.constant dense<0.000000e+00> : vector<16x64xf32>
    %3 = tpu.matmul %1, %2, %cst {dimension_numbers = #tpu.dot_dimension_numbers<[1], [0], [0], [1], [0, 0, 1, 1], [], []>} : vector<16x32xbf16>, vector<32x64xbf16>, vector<16x64xf32> -> vector<16x64xf32>
    %c0_3 = arith.constant 0 : index
    %c0_4 = arith.constant 0 : index
    %4 = vector.load %arg3[%c0_3, %c0_4] : memref<1x64xf32, #tpu.memory_space<vmem>>, vector<1x64xf32>
    %5 = vector.broadcast %4 : vector<1x64xf32> to vector<16x64xf32>
    %6 = arith.addf %3, %5 : vector<16x64xf32>
    %c0_5 = arith.constant 0 : index
    %c0_6 = arith.constant 0 : index
    %7 = vector.load %arg4[%c0_5, %c0_6] : memref<16x64xf32, #tpu.memory_space<vmem>>, vector<16x64xf32>
    tpu.vector_store %arg4[%c0_5, %c0_6], %6 {strides = array<i32>} : memref<16x64xf32, #tpu.memory_space<vmem>>, vector<16x64xf32>,
    return
  }
  func.func @transform_0(%arg0: i32) -> (i32, i32) {
    %c0_i32 = arith.constant 0 : i32
    %c0_i32_0 = arith.constant 0 : i32
    return %arg0, %c0_i32 : i32, i32
  }
  func.func @transform_1(%arg0: i32) -> (i32, i32) {
    %c0_i32 = arith.constant 0 : i32
    %c0_i32_0 = arith.constant 0 : i32
    %c0_i32_1 = arith.constant 0 : i32
    return %c0_i32, %c0_i32_0 : i32, i32
  }
  func.func @transform_2(%arg0: i32) -> (i32, i32) {
    %c0_i32 = arith.constant 0 : i32
    %c0_i32_0 = arith.constant 0 : i32
    %c0_i32_1 = arith.constant 0 : i32
    return %c0_i32, %c0_i32_0 : i32, i32
  }
  func.func @transform_3(%arg0: i32) -> (i32, i32) {
    %c0_i32 = arith.constant 0 : i32
    %c0_i32_0 = arith.constant 0 : i32
    return %arg0, %c0_i32 : i32, i32
  }
}

module attributes {stable_mosaic.version = 11 : i64} {
  func.func @_ffn_add_ln_kernel(%arg0: i32, %arg1: memref<16x32xf32, #tpu.memory_space<vmem>>, %arg2: memref<32x64xbf16, #tpu.memory_space<vmem>>, %arg3: memref<1x64xf32, #tpu.memory_space<vmem>>, %arg4: memref<64x32xbf16, #tpu.memory_space<vmem>>, %arg5: memref<1x32xf32, #tpu.memory_space<vmem>>, %arg6: memref<1x32xf32, #tpu.memory_space<vmem>>, %arg7: memref<1x32xf32, #tpu.memory_space<vmem>>, %arg8: memref<16x32xf32, #tpu.memory_space<vmem>>) attributes {dimension_semantics = [#tpu.dimension_semantics<parallel>], iteration_bounds = array<i64: 1>, scalar_prefetch = 0 : i64, scratch_operands = 0 : i64, tpu.core_type = #tpu.core_type<tc>, window_params = [{transform_indices = @transform_0, window_bounds = array<i64: 16, 32>}, {pipeline_mode = #tpu.pipeline_mode<synchronous>, transform_indices = @transform_1, window_bounds = array<i64: 32, 64>}, {pipeline_mode = #tpu.pipeline_mode<synchronous>, transform_indices = @transform_2, window_bounds = array<i64: 1, 64>}, {pipeline_mode = #tpu.pipeline_mode<synchronous>, transform_indices = @transform_3, window_bounds = array<i64: 64, 32>}, {pipeline_mode = #tpu.pipeline_mode<synchronous>, transform_indices = @transform_4, window_bounds = array<i64: 1, 32>}, {pipeline_mode = #tpu.pipeline_mode<synchronous>, transform_indices = @transform_5, window_bounds = array<i64: 1, 32>}, {pipeline_mode = #tpu.pipeline_mode<synchronous>, transform_indices = @transform_6, window_bounds = array<i64: 1, 32>}, {transform_indices = @transform_7, window_bounds = array<i64: 16, 32>}]} {
    %c0 = arith.constant 0 : index
    %c0_0 = arith.constant 0 : index
    %0 = vector.load %arg1[%c0, %c0_0] : memref<16x32xf32, #tpu.memory_space<vmem>>, vector<16x32xf32>
    %1 = arith.truncf %0 : vector<16x32xf32> to vector<16x32xbf16>
    %c0_1 = arith.constant 0 : index
    %c0_2 = arith.constant 0 : index
    %2 = vector.load %arg2[%c0_1, %c0_2] : memref<32x64xbf16, #tpu.memory_space<vmem>>, vector<32x64xbf16>
    %cst = arith.constant dense<0.000000e+00> : vector<16x64xf32>
    %3 = tpu.matmul %1, %2, %cst {dimension_numbers = #tpu.dot_dimension_numbers<[1], [0], [0], [1], [0, 0, 1, 1], [], []>} : vector<16x32xbf16>, vector<32x64xbf16>, vector<16x64xf32> -> vector<16x64xf32>
    %c0_3 = arith.constant 0 : index
    %c0_4 = arith.constant 0 : index
    %4 = vector.load %arg3[%c0_3, %c0_4] : memref<1x64xf32, #tpu.memory_space<vmem>>, vector<1x64xf32>
    %5 = vector.broadcast %4 : vector<1x64xf32> to vector<16x64xf32>
    %6 = arith.addf %3, %5 : vector<16x64xf32>
    %cst_5 = arith.constant 0.000000e+00 : f32
    %7 = vector.broadcast %cst_5 : f32 to vector<16x64xf32>
    %8 = arith.maximumf %6, %7 : vector<16x64xf32>
    %9 = arith.truncf %8 : vector<16x64xf32> to vector<16x64xbf16>
    %c0_6 = arith.constant 0 : index
    %c0_7 = arith.constant 0 : index
    %10 = vector.load %arg4[%c0_6, %c0_7] : memref<64x32xbf16, #tpu.memory_space<vmem>>, vector<64x32xbf16>
    %cst_8 = arith.constant dense<0.000000e+00> : vector<16x32xf32>
    %11 = tpu.matmul %9, %10, %cst_8 {dimension_numbers = #tpu.dot_dimension_numbers<[1], [0], [0], [1], [0, 0, 1, 1], [], []>} : vector<16x64xbf16>, vector<64x32xbf16>, vector<16x32xf32> -> vector<16x32xf32>
    %c0_9 = arith.constant 0 : index
    %c0_10 = arith.constant 0 : index
    %12 = vector.load %arg5[%c0_9, %c0_10] : memref<1x32xf32, #tpu.memory_space<vmem>>, vector<1x32xf32>
    %13 = vector.broadcast %12 : vector<1x32xf32> to vector<16x32xf32>
    %14 = arith.addf %11, %13 : vector<16x32xf32>
    %15 = arith.addf %14, %0 : vector<16x32xf32>
    %c0_11 = arith.constant 0 : index
    %c0_12 = arith.constant 0 : index
    %16 = vector.load %arg6[%c0_11, %c0_12] : memref<1x32xf32, #tpu.memory_space<vmem>>, vector<1x32xf32>
    %c0_13 = arith.constant 0 : index
    %c0_14 = arith.constant 0 : index
    %17 = vector.load %arg7[%c0_13, %c0_14] : memref<1x32xf32, #tpu.memory_space<vmem>>, vector<1x32xf32>
    %cst_15 = arith.constant dense<0.000000e+00> : vector<16xf32>
    %18 = vector.multi_reduction <add>, %15, %cst_15 [1] : vector<16x32xf32> to vector<16xf32>
    %19 = vector.shape_cast %18 : vector<16xf32> to vector<16x1xf32>
    %cst_16 = arith.constant 3.200000e+01 : f32
    %20 = vector.broadcast %cst_16 : f32 to vector<16x1xf32>
    %21 = arith.divf %19, %20 : vector<16x1xf32>
    %22 = vector.broadcast %21 : vector<16x1xf32> to vector<16x32xf32>
    %23 = arith.subf %15, %22 : vector<16x32xf32>
    %24 = arith.mulf %23, %23 : vector<16x32xf32>
    %cst_17 = arith.constant dense<0.000000e+00> : vector<16xf32>
    %25 = vector.multi_reduction <add>, %24, %cst_17 [1] : vector<16x32xf32> to vector<16xf32>
    %26 = vector.shape_cast %25 : vector<16xf32> to vector<16x1xf32>
    %cst_18 = arith.constant 3.200000e+01 : f32
    %27 = vector.broadcast %cst_18 : f32 to vector<16x1xf32>
    %28 = arith.divf %26, %27 : vector<16x1xf32>
    %29 = vector.broadcast %21 : vector<16x1xf32> to vector<16x32xf32>
    %30 = arith.subf %15, %29 : vector<16x32xf32>
    %cst_19 = arith.constant 9.99999974E-6 : f32
    %31 = vector.broadcast %cst_19 : f32 to vector<16x1xf32>
    %32 = arith.addf %28, %31 : vector<16x1xf32>
    %33 = math.rsqrt %32 : vector<16x1xf32>
    %34 = vector.broadcast %33 : vector<16x1xf32> to vector<16x32xf32>
    %35 = arith.mulf %30, %34 : vector<16x32xf32>
    %36 = vector.broadcast %16 : vector<1x32xf32> to vector<16x32xf32>
    %37 = arith.mulf %35, %36 : vector<16x32xf32>
    %38 = vector.broadcast %17 : vector<1x32xf32> to vector<16x32xf32>
    %39 = arith.addf %37, %38 : vector<16x32xf32>
    %c0_20 = arith.constant 0 : index
    %c0_21 = arith.constant 0 : index
    %40 = vector.load %arg8[%c0_20, %c0_21] : memref<16x32xf32, #tpu.memory_space<vmem>>, vector<16x32xf32>
    tpu.vector_store %arg8[%c0_20, %c0_21], %39 {strides = array<i32>} : memref<16x32xf32, #tpu.memory_space<vmem>>, vector<16x32xf32>,
    return
  }
  func.func @transform_0(%arg0: i32) -> (i32, i32) {
    %c0_i32 = arith.constant 0 : i32
    %c0_i32_0 = arith.constant 0 : i32
    return %arg0, %c0_i32 : i32, i32
  }
  func.func @transform_1(%arg0: i32) -> (i32, i32) {
    %c0_i32 = arith.constant 0 : i32
    %c0_i32_0 = arith.constant 0 : i32
    %c0_i32_1 = arith.constant 0 : i32
    return %c0_i32, %c0_i32_0 : i32, i32
  }
  func.func @transform_2(%arg0: i32) -> (i32, i32) {
    %c0_i32 = arith.constant 0 : i32
    %c0_i32_0 = arith.constant 0 : i32
    %c0_i32_1 = arith.constant 0 : i32
    return %c0_i32, %c0_i32_0 : i32, i32
  }
  func.func @transform_3(%arg0: i32) -> (i32, i32) {
    %c0_i32 = arith.constant 0 : i32
    %c0_i32_0 = arith.constant 0 : i32
    %c0_i32_1 = arith.constant 0 : i32
    return %c0_i32, %c0_i32_0 : i32, i32
  }
  func.func @transform_4(%arg0: i32) -> (i32, i32) {
    %c0_i32 = arith.constant 0 : i32
    %c0_i32_0 = arith.constant 0 : i32
    %c0_i32_1 = arith.constant 0 : i32
    return %c0_i32, %c0_i32_0 : i32, i32
  }
  func.func @transform_5(%arg0: i32) -> (i32, i32) {
    %c0_i32 = arith.constant 0 : i32
    %c0_i32_0 = arith.constant 0 : i32
    %c0_i32_1 = arith.constant 0 : i32
    return %c0_i32, %c0_i32_0 : i32, i32
  }
  func.func @transform_6(%arg0: i32) -> (i32, i32) {
    %c0_i32 = arith.constant 0 : i32
    %c0_i32_0 = arith.constant 0 : i32
    %c0_i32_1 = arith.constant 0 : i32
    return %c0_i32, %c0_i32_0 : i32, i32
  }
  func.func @transform_7(%arg0: i32) -> (i32, i32) {
    %c0_i32 = arith.constant 0 : i32
    %c0_i32_0 = arith.constant 0 : i32
    return %arg0, %c0_i32 : i32, i32
  }
}

module attributes {stable_mosaic.version = 11 : i64} {
  func.func @_layernorm_kernel(%arg0: i32, %arg1: memref<16x32xf32, #tpu.memory_space<vmem>>, %arg2: memref<1x32xf32, #tpu.memory_space<vmem>>, %arg3: memref<1x32xf32, #tpu.memory_space<vmem>>, %arg4: memref<16x32xf32, #tpu.memory_space<vmem>>) attributes {dimension_semantics = [#tpu.dimension_semantics<parallel>], iteration_bounds = array<i64: 1>, scalar_prefetch = 0 : i64, scratch_operands = 0 : i64, tpu.core_type = #tpu.core_type<tc>, window_params = [{transform_indices = @transform_0, window_bounds = array<i64: 16, 32>}, {pipeline_mode = #tpu.pipeline_mode<synchronous>, transform_indices = @transform_1, window_bounds = array<i64: 1, 32>}, {pipeline_mode = #tpu.pipeline_mode<synchronous>, transform_indices = @transform_2, window_bounds = array<i64: 1, 32>}, {transform_indices = @transform_3, window_bounds = array<i64: 16, 32>}]} {
    %c0 = arith.constant 0 : index
    %c0_0 = arith.constant 0 : index
    %0 = vector.load %arg1[%c0, %c0_0] : memref<16x32xf32, #tpu.memory_space<vmem>>, vector<16x32xf32>
    %c0_1 = arith.constant 0 : index
    %c0_2 = arith.constant 0 : index
    %1 = vector.load %arg2[%c0_1, %c0_2] : memref<1x32xf32, #tpu.memory_space<vmem>>, vector<1x32xf32>
    %c0_3 = arith.constant 0 : index
    %c0_4 = arith.constant 0 : index
    %2 = vector.load %arg3[%c0_3, %c0_4] : memref<1x32xf32, #tpu.memory_space<vmem>>, vector<1x32xf32>
    %cst = arith.constant dense<0.000000e+00> : vector<16xf32>
    %3 = vector.multi_reduction <add>, %0, %cst [1] : vector<16x32xf32> to vector<16xf32>
    %4 = vector.shape_cast %3 : vector<16xf32> to vector<16x1xf32>
    %cst_5 = arith.constant 3.200000e+01 : f32
    %5 = vector.broadcast %cst_5 : f32 to vector<16x1xf32>
    %6 = arith.divf %4, %5 : vector<16x1xf32>
    %7 = vector.broadcast %6 : vector<16x1xf32> to vector<16x32xf32>
    %8 = arith.subf %0, %7 : vector<16x32xf32>
    %9 = arith.mulf %8, %8 : vector<16x32xf32>
    %cst_6 = arith.constant dense<0.000000e+00> : vector<16xf32>
    %10 = vector.multi_reduction <add>, %9, %cst_6 [1] : vector<16x32xf32> to vector<16xf32>
    %11 = vector.shape_cast %10 : vector<16xf32> to vector<16x1xf32>
    %cst_7 = arith.constant 3.200000e+01 : f32
    %12 = vector.broadcast %cst_7 : f32 to vector<16x1xf32>
    %13 = arith.divf %11, %12 : vector<16x1xf32>
    %14 = vector.broadcast %6 : vector<16x1xf32> to vector<16x32xf32>
    %15 = arith.subf %0, %14 : vector<16x32xf32>
    %cst_8 = arith.constant 9.99999974E-6 : f32
    %16 = vector.broadcast %cst_8 : f32 to vector<16x1xf32>
    %17 = arith.addf %13, %16 : vector<16x1xf32>
    %18 = math.rsqrt %17 : vector<16x1xf32>
    %19 = vector.broadcast %18 : vector<16x1xf32> to vector<16x32xf32>
    %20 = arith.mulf %15, %19 : vector<16x32xf32>
    %21 = vector.broadcast %1 : vector<1x32xf32> to vector<16x32xf32>
    %22 = arith.mulf %20, %21 : vector<16x32xf32>
    %23 = vector.broadcast %2 : vector<1x32xf32> to vector<16x32xf32>
    %24 = arith.addf %22, %23 : vector<16x32xf32>
    %c0_9 = arith.constant 0 : index
    %c0_10 = arith.constant 0 : index
    %25 = vector.load %arg4[%c0_9, %c0_10] : memref<16x32xf32, #tpu.memory_space<vmem>>, vector<16x32xf32>
    tpu.vector_store %arg4[%c0_9, %c0_10], %24 {strides = array<i32>} : memref<16x32xf32, #tpu.memory_space<vmem>>, vector<16x32xf32>,
    return
  }
  func.func @transform_0(%arg0: i32) -> (i32, i32) {
    %c0_i32 = arith.constant 0 : i32
    %c0_i32_0 = arith.constant 0 : i32
    return %arg0, %c0_i32 : i32, i32
  }
  func.func @transform_1(%arg0: i32) -> (i32, i32) {
    %c0_i32 = arith.constant 0 : i32
    %c0_i32_0 = arith.constant 0 : i32
    %c0_i32_1 = arith.constant 0 : i32
    return %c0_i32, %c0_i32_0 : i32, i32
  }
  func.func @transform_2(%arg0: i32) -> (i32, i32) {
    %c0_i32 = arith.constant 0 : i32
    %c0_i32_0 = arith.constant 0 : i32
    %c0_i32_1 = arith.constant 0 : i32
    return %c0_i32, %c0_i32_0 : i32, i32
  }
  func.func @transform_3(%arg0: i32) -> (i32, i32) {
    %c0_i32 = arith.constant 0 : i32
    %c0_i32_0 = arith.constant 0 : i32
    return %arg0, %c0_i32 : i32, i32
  }
}

</mosaic_0001>

<llo_original>
// kernel: transformer_fwd.35
$region0: #{transformer_fwd.35}
  #allocation0 [shape = 'u32[]', space=smem, size = 0x4, offset = 0x4, fixed_abs, tag = 'smem constant byte address 0x4 - core index']
  #allocation1 [shape = 'u32[72,128]{1,0:T(1,128)}', space=vmem, size = 0x9000, scoped, tag = 'internal scratch']
  %s0 = inlined_call_operand.vmem [shape: f32[16,32], index: 0, kind: input, shape index: {}]
  %s1 = inlined_call_operand.vmem [shape: bf16[32,96], index: 1, kind: input, shape index: {}]
  %s2 = inlined_call_operand.vmem [shape: f32[1,96], index: 2, kind: input, shape index: {}]
  %s3 = inlined_call_operand.vmem [shape: f32[16,96], index: 3, kind: output, shape index: {}]
  %s4 = sld [smem:[#allocation0]]
  $region22: #{transformer_fwd.35} parent=0
    _
  %s6 = ssub.s32 1, %s4
  %s7 = scalar_select 0, %s6, %s4
  // Predicated region
  $region2: #{transformer_fwd.35} parent=0 // pred_check
    _
  $region3: #{transformer_fwd.35} parent=0 // pred_check_branch
    %9 = sbr.rel (0) target = $region5
  $region4: #{transformer_fwd.35} parent=0 // pred_region
    _
  $region5: #{transformer_fwd.35} parent=0 // pred_fallthru
    _
  // Predicated region
  $region6: #{transformer_fwd.35} parent=0 // pred_check
    _
  $region7: #{transformer_fwd.35} parent=0 // pred_check_branch
    %11 = sbr.rel (0) target = $region9
  $region8: #{transformer_fwd.35} parent=0 // pred_region
    _
  $region9: #{transformer_fwd.35} parent=0 // pred_fallthru
    _
  // Predicated region
  $region10: #{transformer_fwd.35} parent=0 // pred_check
    _
  $region11: #{transformer_fwd.35} parent=0 // pred_check_branch
    %13 = sbr.rel (0) target = $region13
  $region12: #{transformer_fwd.35} parent=0 // pred_region
    _
  $region13: #{transformer_fwd.35} parent=0 // pred_fallthru
    _
  %v15 = vld [vmem:[%s0] sm:$0xff]
  %v16 = vld [vmem:[%s0 + $0x8] sm:$0xff]
  %v17 = vpack.c.bf16 %v16, %v15
  %v18 = vld [vmem:[%s1] sm:$0xf]
  %v19 = vld [vmem:[%s1 + $0x4] sm:$0xf]
  %v20 = vld [vmem:[%s1 + $0x8] sm:$0xf]
  %v21 = vld [vmem:[%s1 + $0xc] sm:$0xf]
  %v22 = vld [vmem:[%s2] sm:$0x1]
  %v24 = vperm.slane %v22, 0
  %v30 = vunpack.c.l.b16 %v18
  %v31 = vunpack.c.l.b16 %v19
  %v32 = vunpack.c.l.b16 %v20
  %v33 = vunpack.c.l.b16 %v21
  %v34 = vpack.c.b16 %v31, %v30
  %v35 = vpack.c.b16 %v33, %v32
  %vm38 = vcmask 261120
  %v40 = vsel %vm38, %v17, 0
  %42 = vmatpush.bf16.msra.mxu0 0
  %43 = vmatpush.bf16.msra.mxu0 0
  %44 = vmatpush.bf16.msra.mxu0 0
  %45 = vmatpush.bf16.msra.mxu0 0
  %46 = vmatpush.bf16.msra.mxu0 0
  %47 = vmatpush.bf16.msra.mxu0 0
  %48 = vmatpush.bf16.msra.mxu0 %v35
  %49 = vmatpush.bf16.msra.mxu0 %v34
  %50 = vmatmul.bf16.gmra.mxu0 %v40
  %v51 = vpop.f32.mrf.mxu0
  %v52 = vadd.f32 %v24, %v51
  %v53 = vpop.f32.mrf.mxu0
  %v54 = vadd.f32 %v24, %v53
  %55 = vdwg.mxu0
  %vm56 = vcmask 785408
  %57 = vst.msk [vmem:[%s3] sm:$0xff] %vm56, %v52
  %58 = vst.msk [vmem:[%s3 + $0x8] sm:$0xff] %vm56, %v54
  // Predicated region
  $region14: #{transformer_fwd.35} parent=0 // pred_check
    _
  $region15: #{transformer_fwd.35} parent=0 // pred_check_branch
    %60 = sbr.rel (0) target = $region17
  $region16: #{transformer_fwd.35} parent=0 // pred_region
    _
  $region17: #{transformer_fwd.35} parent=0 // pred_fallthru
    _
  // Predicated region
  $region18: #{transformer_fwd.35} parent=0 // pred_check
    _
  $region19: #{transformer_fwd.35} parent=0 // pred_check_branch
    %62 = sbr.rel (0) target = $region21
  $region20: #{transformer_fwd.35} parent=0 // pred_region
    _
  $region21: #{transformer_fwd.35} parent=0 // pred_fallthru
    _

// kernel: transformer_fwd.36
$region0: #{transformer_fwd.36}
  #allocation0 [shape = 'u32[]', space=smem, size = 0x4, offset = 0x4, fixed_abs, tag = 'smem constant byte address 0x4 - core index']
  #allocation1 [shape = 'u32[72,128]{1,0:T(1,128)}', space=vmem, size = 0x9000, scoped, tag = 'internal scratch']
  %s0 = inlined_call_operand.vmem [shape: f32[2,4,8,8], index: 0, kind: input, shape index: {}]
  %s1 = inlined_call_operand.vmem [shape: f32[2,4,8,8], index: 1, kind: input, shape index: {}]
  %s2 = inlined_call_operand.vmem [shape: f32[2,4,8,8], index: 2, kind: input, shape index: {}]
  %s3 = inlined_call_operand.vmem [shape: f32[8,8], index: 3, kind: input, shape index: {}]
  %s4 = inlined_call_operand.vmem [shape: f32[2,1,8], index: 4, kind: input, shape index: {}]
  %s5 = inlined_call_operand.vmem [shape: f32[2,4,8,8], index: 5, kind: output, shape index: {}]
  %s6 = sld [smem:[#allocation0]]
  $region53: #{transformer_fwd.36} parent=0
    _
  %s8 = ssub.s32 1, %s6
  %s9 = scalar_select 0, %s8, %s6
  loop: start=0, step=1, limit=4
  $region2: #{transformer_fwd.36} parent=0 // loop_pre_header
    _
  $region3: #{transformer_fwd.36} parent=0 // loop_header
    %s11 = sphi 0, %s15
    %p12 = scmp.ge.s32.totalorder %s11, 4
    %s21 = sphi 0, %s23
    %s24 = sphi 0, %s21
    %s25 = sphi 0, %s24
    %s41 = sphi 0, %s25
    %s47 = sphi 0, %s49
    %s50 = sphi 0, %s47
    %s51 = sphi 0, %s50
    %s67 = sphi 0, %s51
    %s73 = sphi 0, %s75
    %s76 = sphi 0, %s73
    %s77 = sphi 0, %s76
    %s93 = sphi 0, %s77
    %s97 = sphi 0, %s97
    %s99 = sphi 0, %s97
    %s100 = sphi 0, %s99
    %s114 = sphi 0, %s100
    %s120 = sphi 0, %s122
    %s123 = sphi 0, %s120
    %s124 = sphi 0, %s123
    %s140 = sphi 0, %s124
    %s146 = sphi 0, %s148
    %s149 = sphi 0, %s146
    %s150 = sphi 0, %s149
    %s166 = sphi 0, %s150
  $region4: #{transformer_fwd.36} parent=0 // loop_header_branch
    %14 = sbr.rel (%p12) target = $region8
  $region5: #{transformer_fwd.36} parent=0 // loop_body
    %s16 = ssub.s32 %s11, 1
    %s17 = ssub.s32 %s11, 2
    %s18 = sadd.s32 %s11, 1
    %s19 = ssub.s32 %s11, %s18
    %p20 = scmp.eq.s32.totalorder %s19, 0
    %s22 = sadd.s32 %s21, 1
    %s23 = scalar_select %p20, %s21, %s22
    %p26 = pneg %p20
    %p27 = scmp.eq.s32.totalorder %s11, 1
    %p28 = por %p26, %p27
    %p29 = scmp.ne.s32.totalorder %s21, %s24
    %p30 = scmp.eq.s32.totalorder %s11, 0
    %p31 = por %p29, %p30
    %p32 = scmp.ne.s32.totalorder %s21, %s24
    %p33 = scmp.eq.s32.totalorder %s16, 1
    %p34 = por %p32, %p33
    %p35 = scmp.ne.s32.totalorder %s24, %s25
    %p36 = scmp.eq.s32.totalorder %s16, 0
    %p37 = por %p35, %p36
    %p38 = scmp.ne.s32.totalorder %s24, %s25
    %p39 = scmp.eq.s32.totalorder %s17, 1
    %p40 = por %p38, %p39
    %p42 = scmp.ne.s32.totalorder %s25, %s41
    %p43 = scmp.eq.s32.totalorder %s17, 0
    %p44 = por %p42, %p43
    %s45 = ssub.s32 %s11, %s18
    %p46 = scmp.eq.s32.totalorder %s45, 0
    %s48 = sadd.s32 %s47, 1
    %s49 = scalar_select %p46, %s47, %s48
    %p52 = pneg %p46
    %p53 = scmp.eq.s32.totalorder %s11, 1
    %p54 = por %p52, %p53
    %p55 = scmp.ne.s32.totalorder %s47, %s50
    %p56 = scmp.eq.s32.totalorder %s11, 0
    %p57 = por %p55, %p56
    %p58 = scmp.ne.s32.totalorder %s47, %s50
    %p59 = scmp.eq.s32.totalorder %s16, 1
    %p60 = por %p58, %p59
    %p61 = scmp.ne.s32.totalorder %s50, %s51
    %p62 = scmp.eq.s32.totalorder %s16, 0
    %p63 = por %p61, %p62
    %p64 = scmp.ne.s32.totalorder %s50, %s51
    %p65 = scmp.eq.s32.totalorder %s17, 1
    %p66 = por %p64, %p65
    %p68 = scmp.ne.s32.totalorder %s51, %s67
    %p69 = scmp.eq.s32.totalorder %s17, 0
    %p70 = por %p68, %p69
    %s71 = ssub.s32 %s11, %s18
    %p72 = scmp.eq.s32.totalorder %s71, 0
    %s74 = sadd.s32 %s73, 1
    %s75 = scalar_select %p72, %s73, %s74
    %p78 = pneg %p72
    %p79 = scmp.eq.s32.totalorder %s11, 1
    %p80 = por %p78, %p79
    %p81 = scmp.ne.s32.totalorder %s73, %s76
    %p82 = scmp.eq.s32.totalorder %s11, 0
    %p83 = por %p81, %p82
    %p84 = scmp.ne.s32.totalorder %s73, %s76
    %p85 = scmp.eq.s32.totalorder %s16, 1
    %p86 = por %p84, %p85
    %p87 = scmp.ne.s32.totalorder %s76, %s77
    %p88 = scmp.eq.s32.totalorder %s16, 0
    %p89 = por %p87, %p88
    %p90 = scmp.ne.s32.totalorder %s76, %s77
    %p91 = scmp.eq.s32.totalorder %s17, 1
    %p92 = por %p90, %p91
    %p94 = scmp.ne.s32.totalorder %s77, %s93
    %p95 = scmp.eq.s32.totalorder %s17, 0
    %p96 = por %p94, %p95
    %s98 = sadd.s32 %s97, 1
    %p101 = scmp.eq.s32.totalorder %s11, 1
    %p102 = scmp.ne.s32.totalorder %s97, %s99
    %p103 = scmp.eq.s32.totalorder %s11, 0
    %p104 = por %p102, %p103
    %p105 = scmp.ne.s32.totalorder %s97, %s99
    %p106 = scmp.eq.s32.totalorder %s16, 1
    %p107 = por %p105, %p106
    %p108 = scmp.ne.s32.totalorder %s99, %s100
    %p109 = scmp.eq.s32.totalorder %s16, 0
    %p110 = por %p108, %p109
    %p111 = scmp.ne.s32.totalorder %s99, %s100
    %p112 = scmp.eq.s32.totalorder %s17, 1
    %p113 = por %p111, %p112
    %p115 = scmp.ne.s32.totalorder %s100, %s114
    %p116 = scmp.eq.s32.totalorder %s17, 0
    %p117 = por %p115, %p116
    %s118 = ssub.s32 %s11, %s18
    %p119 = scmp.eq.s32.totalorder %s118, 0
    %s121 = sadd.s32 %s120, 1
    %s122 = scalar_select %p119, %s120, %s121
    %p125 = pneg %p119
    %p126 = scmp.eq.s32.totalorder %s11, 1
    %p127 = por %p125, %p126
    %p128 = scmp.ne.s32.totalorder %s120, %s123
    %p129 = scmp.eq.s32.totalorder %s11, 0
    %p130 = por %p128, %p129
    %p131 = scmp.ne.s32.totalorder %s120, %s123
    %p132 = scmp.eq.s32.totalorder %s16, 1
    %p133 = por %p131, %p132
    %p134 = scmp.ne.s32.totalorder %s123, %s124
    %p135 = scmp.eq.s32.totalorder %s16, 0
    %p136 = por %p134, %p135
    %p137 = scmp.ne.s32.totalorder %s123, %s124
    %p138 = scmp.eq.s32.totalorder %s17, 1
    %p139 = por %p137, %p138
    %p141 = scmp.ne.s32.totalorder %s124, %s140
    %p142 = scmp.eq.s32.totalorder %s17, 0
    %p143 = por %p141, %p142
    %s144 = ssub.s32 %s11, %s18
    %p145 = scmp.eq.s32.totalorder %s144, 0
    %s147 = sadd.s32 %s146, 1
    %s148 = scalar_select %p145, %s146, %s147
    %p151 = pneg %p145
    %p152 = scmp.eq.s32.totalorder %s11, 1
    %p153 = por %p151, %p152
    %p154 = scmp.ne.s32.totalorder %s146, %s149
    %p155 = scmp.eq.s32.totalorder %s11, 0
    %p156 = por %p154, %p155
    %p157 = scmp.ne.s32.totalorder %s146, %s149
    %p158 = scmp.eq.s32.totalorder %s16, 1
    %p159 = por %p157, %p158
    %p160 = scmp.ne.s32.totalorder %s149, %s150
    %p161 = scmp.eq.s32.totalorder %s16, 0
    %p162 = por %p160, %p161
    %p163 = scmp.ne.s32.totalorder %s149, %s150
    %p164 = scmp.eq.s32.totalorder %s17, 1
    %p165 = por %p163, %p164
    %p167 = scmp.ne.s32.totalorder %s150, %s166
    %p168 = scmp.eq.s32.totalorder %s17, 0
    %p169 = por %p167, %p168
    %p170 = scmp.le.s32.totalorder 1, %s11
    %p171 = scmp.lt.s32.totalorder %s11, 3
    %p172 = pnand %p170, %p171
    %p173 = pneg %p172
    // Predicated region
    $region9: #{transformer_fwd.36} parent=5 // pred_check
      _
    $region10: #{transformer_fwd.36} parent=5 // pred_check_branch
      %175 = sbr.rel (%p172) target = $region12
    $region11: #{transformer_fwd.36} parent=5 // pred_region
      %s176 = ssub.s32 %s11, 1
      // Predicated region
      $region13: #{transformer_fwd.36} parent=11 // pred_check
        %p177 = pneg %p110
      $region14: #{transformer_fwd.36} parent=11 // pred_check_branch
        %179 = sbr.rel (%p177) target = $region16
      $region15: #{transformer_fwd.36} parent=11 // pred_region
        _
      $region16: #{transformer_fwd.36} parent=11 // pred_fallthru
        _
    $region12: #{transformer_fwd.36} parent=5 // pred_fallthru
      _
    %p180 = scmp.lt.s32.totalorder %s11, 2
    // Predicated region
    $region17: #{transformer_fwd.36} parent=5 // pred_check
      %p181 = pneg %p180
    $region18: #{transformer_fwd.36} parent=5 // pred_check_branch
      %183 = sbr.rel (%p181) target = $region20
    $region19: #{transformer_fwd.36} parent=5 // pred_region
      // Predicated region
      $region21: #{transformer_fwd.36} parent=19 // pred_check
        %p184 = pneg %p31
      $region22: #{transformer_fwd.36} parent=19 // pred_check_branch
        %186 = sbr.rel (%p184) target = $region24
      $region23: #{transformer_fwd.36} parent=19 // pred_region
        %p187 = scmp.lt.s32.totalorder %s11, 1
        %s188 = scalar_select %p187, %s11, 1
        %s189 = smul.addr %s188, 4
        %s190 = smul.addr %s189, 8
        %s191 = scalar_lea.vmem %s0, %s190
      $region24: #{transformer_fwd.36} parent=19 // pred_fallthru
        _
      // Predicated region
      $region25: #{transformer_fwd.36} parent=19 // pred_check
        %p192 = pneg %p57
      $region26: #{transformer_fwd.36} parent=19 // pred_check_branch
        %194 = sbr.rel (%p192) target = $region28
      $region27: #{transformer_fwd.36} parent=19 // pred_region
        %p195 = scmp.lt.s32.totalorder %s11, 1
        %s196 = scalar_select %p195, %s11, 1
        %s197 = smul.addr %s196, 4
        %s198 = smul.addr %s197, 8
        %s199 = scalar_lea.vmem %s1, %s198
      $region28: #{transformer_fwd.36} parent=19 // pred_fallthru
        _
      // Predicated region
      $region29: #{transformer_fwd.36} parent=19 // pred_check
        %p200 = pneg %p83
      $region30: #{transformer_fwd.36} parent=19 // pred_check_branch
        %202 = sbr.rel (%p200) target = $region32
      $region31: #{transformer_fwd.36} parent=19 // pred_region
        %p203 = scmp.lt.s32.totalorder %s11, 1
        %s204 = scalar_select %p203, %s11, 1
        %s205 = smul.addr %s204, 4
        %s206 = smul.addr %s205, 8
        %s207 = scalar_lea.vmem %s2, %s206
      $region32: #{transformer_fwd.36} parent=19 // pred_fallthru
        _
      // Predicated region
      $region33: #{transformer_fwd.36} parent=19 // pred_check
        %p208 = pneg %p130
      $region34: #{transformer_fwd.36} parent=19 // pred_check_branch
        %210 = sbr.rel (%p208) target = $region36
      $region35: #{transformer_fwd.36} parent=19 // pred_region
        %p211 = scmp.lt.s32.totalorder %s11, 1
        %s212 = scalar_select %p211, %s11, 1
        %s213 = scalar_lea.vmem %s4, %s212
      $region36: #{transformer_fwd.36} parent=19 // pred_fallthru
        _
    $region20: #{transformer_fwd.36} parent=5 // pred_fallthru
      _
    %p214 = scmp.le.s32.totalorder 1, %s11
    %p215 = scmp.lt.s32.totalorder %s11, 3
    %p216 = pnand %p214, %p215
    %p217 = pneg %p216
    // Predicated region
    $region37: #{transformer_fwd.36} parent=5 // pred_check
      _
    $region38: #{transformer_fwd.36} parent=5 // pred_check_branch
      %219 = sbr.rel (%p216) target = $region40
    $region39: #{transformer_fwd.36} parent=5 // pred_region
      %s220 = ssub.s32 %s11, 1
      %p221 = scmp.lt.s32.totalorder %s16, 1
      %s222 = scalar_select %p221, %s16, 1
      %s223 = smul.addr %s222, 4
      %s224 = smul.addr %s223, 8
      %s225 = scalar_lea.vmem %s0, %s224
      %p226 = pneg %p37
      %p227 = pneg %p34
      %p228 = scmp.lt.s32.totalorder %s16, 1
      %s229 = scalar_select %p228, %s16, 1
      %s230 = smul.addr %s229, 4
      %s231 = smul.addr %s230, 8
      %s232 = scalar_lea.vmem %s1, %s231
      %p233 = pneg %p63
      %p234 = pneg %p60
      %p235 = scmp.lt.s32.totalorder %s16, 1
      %s236 = scalar_select %p235, %s16, 1
      %s237 = smul.addr %s236, 4
      %s238 = smul.addr %s237, 8
      %s239 = scalar_lea.vmem %s2, %s238
      %p240 = pneg %p89
      %p241 = pneg %p86
      %p242 = pneg %p110
      %p243 = pneg %p107
      %p244 = scmp.lt.s32.totalorder %s16, 1
      %s245 = scalar_select %p244, %s16, 1
      %s246 = scalar_lea.vmem %s4, %s245
      %p247 = pneg %p136
      %p248 = pneg %p133
      %p249 = pneg %p162
      %p250 = pneg %p159
      %p251 = scmp.lt.s32.totalorder %s16, 1
      %s252 = scalar_select %p251, %s16, 1
      %s253 = smul.addr %s252, 4
      %s254 = smul.addr %s253, 8
      %s255 = scalar_lea.vmem %s5, %s254
      %p256 = scmp.lt.s32.totalorder %s16, 1
      %s257 = scalar_select %p256, %s16, 1
      %s258 = smul.addr %s257, 4
      %s259 = smul.addr %s258, 8
      %s260 = scalar_lea.vmem %s0, %s259
      %p261 = scmp.lt.s32.totalorder %s16, 1
      %s262 = scalar_select %p261, %s16, 1
      %s263 = smul.addr %s262, 4
      %s264 = smul.addr %s263, 8
      %s265 = scalar_lea.vmem %s1, %s264
      %p266 = scmp.lt.s32.totalorder %s16, 1
      %s267 = scalar_select %p266, %s16, 1
      %s268 = smul.addr %s267, 4
      %s269 = smul.addr %s268, 8
      %s270 = scalar_lea.vmem %s2, %s269
      %p271 = scmp.lt.s32.totalorder %s16, 1
      %s272 = scalar_select %p271, %s16, 1
      %s273 = scalar_lea.vmem %s4, %s272
      %p274 = scmp.lt.s32.totalorder %s16, 1
      %s275 = scalar_select %p274, %s16, 1
      %s276 = smul.addr %s275, 4
      %s277 = smul.addr %s276, 8
      %s278 = scalar_lea.vmem %s5, %s277
      %v280 = vld [vmem:[%s260] sm:$0xff]
      %v281 = vld [vmem:[%s260 + $0x8] sm:$0xff]
      %v282 = vld [vmem:[%s260 + $0x10] sm:$0xff]
      %v283 = vld [vmem:[%s260 + $0x18] sm:$0xff]
      %v284 = vpack.c.bf16 %v280, %v280
      %v285 = vpack.c.bf16 %v281, %v281
      %v286 = vpack.c.bf16 %v282, %v282
      %v287 = vpack.c.bf16 %v283, %v283
      %v288 = vld [vmem:[%s265] sm:$0xff]
      %v289 = vld [vmem:[%s265 + $0x8] sm:$0xff]
      %v290 = vld [vmem:[%s265 + $0x10] sm:$0xff]
      %v291 = vld [vmem:[%s265 + $0x18] sm:$0xff]
      %v292 = vpack.c.bf16 %v288, %v288
      %v293 = vpack.c.bf16 %v289, %v289
      %v294 = vpack.c.bf16 %v290, %v290
      %v295 = vpack.c.bf16 %v291, %v291
      %v296 = vld [vmem:[%s270] sm:$0xff]
      %v297 = vld [vmem:[%s270 + $0x8] sm:$0xff]
      %v298 = vld [vmem:[%s270 + $0x10] sm:$0xff]
      %v299 = vld [vmem:[%s270 + $0x18] sm:$0xff]
      %v300 = vpack.c.bf16 %v296, %v296
      %v301 = vpack.c.bf16 %v297, %v297
      %v302 = vpack.c.bf16 %v298, %v298
      %v303 = vpack.c.bf16 %v299, %v299
      %v304 = vld [vmem:[%s3] sm:$0xff]
      %vm305 = vcmask 64512
      %v307 = vsel %vm305, %v284, 0
      %v310 = vsel %vm305, %v292, 0
      %312 = vmatpush.bf16.xpose.msra.mxu0 0
      %313 = vmatpush.bf16.xpose.msra.mxu0 0
      %314 = vmatpush.bf16.xpose.msra.mxu0 0
      %315 = vmatpush.bf16.xpose.msra.mxu0 0
      %316 = vmatpush.bf16.xpose.msra.mxu0 0
      %317 = vmatpush.bf16.xpose.msra.mxu0 0
      %318 = vmatpush.bf16.xpose.msra.mxu0 0
      %319 = vmatpush.bf16.xpose.msra.mxu0 %v310
      %320 = vmatmul.bf16.gmra.mxu0 %v307
      %v321 = vpop.f32.mrf.mxu0
      %v322 = vadd.f32 %v304, %v321
      %v323 = vpop.f32.mrf.mxu0
      %324 = vdwg.mxu0
      %v326 = vsel %vm305, %v285, 0
      %v329 = vsel %vm305, %v293, 0
      %331 = vmatpush.bf16.xpose.msra.mxu0 0
      %332 = vmatpush.bf16.xpose.msra.mxu0 0
      %333 = vmatpush.bf16.xpose.msra.mxu0 0
      %334 = vmatpush.bf16.xpose.msra.mxu0 0
      %335 = vmatpush.bf16.xpose.msra.mxu0 0
      %336 = vmatpush.bf16.xpose.msra.mxu0 0
      %337 = vmatpush.bf16.xpose.msra.mxu0 0
      %338 = vmatpush.bf16.xpose.msra.mxu0 %v329
      %339 = vmatmul.bf16.gmra.mxu0 %v326
      %v340 = vpop.f32.mrf.mxu0
      %v341 = vadd.f32 %v304, %v340
      %v342 = vpop.f32.mrf.mxu0
      %343 = vdwg.mxu0
      %v345 = vsel %vm305, %v286, 0
      %v348 = vsel %vm305, %v294, 0
      %350 = vmatpush.bf16.xpose.msra.mxu0 0
      %351 = vmatpush.bf16.xpose.msra.mxu0 0
      %352 = vmatpush.bf16.xpose.msra.mxu0 0
      %353 = vmatpush.bf16.xpose.msra.mxu0 0
      %354 = vmatpush.bf16.xpose.msra.mxu0 0
      %355 = vmatpush.bf16.xpose.msra.mxu0 0
      %356 = vmatpush.bf16.xpose.msra.mxu0 0
      %357 = vmatpush.bf16.xpose.msra.mxu0 %v348
      %358 = vmatmul.bf16.gmra.mxu0 %v345
      %v359 = vpop.f32.mrf.mxu0
      %v360 = vadd.f32 %v304, %v359
      %v361 = vpop.f32.mrf.mxu0
      %362 = vdwg.mxu0
      %v364 = vsel %vm305, %v287, 0
      %v367 = vsel %vm305, %v295, 0
      %369 = vmatpush.bf16.xpose.msra.mxu0 0
      %370 = vmatpush.bf16.xpose.msra.mxu0 0
      %371 = vmatpush.bf16.xpose.msra.mxu0 0
      %372 = vmatpush.bf16.xpose.msra.mxu0 0
      %373 = vmatpush.bf16.xpose.msra.mxu0 0
      %374 = vmatpush.bf16.xpose.msra.mxu0 0
      %375 = vmatpush.bf16.xpose.msra.mxu0 0
      %376 = vmatpush.bf16.xpose.msra.mxu0 %v367
      %377 = vmatmul.bf16.gmra.mxu0 %v364
      %v378 = vpop.f32.mrf.mxu0
      %v379 = vadd.f32 %v304, %v378
      %v380 = vpop.f32.mrf.mxu0
      %381 = vdwg.mxu0
      %v382 = vld [vmem:[%s273] sm:$0x1]
      %v384 = vperm.slane %v382, 0
      %v386 = vadd.f32 %v322, %v384
      %v387 = vadd.f32 %v341, %v384
      %v388 = vadd.f32 %v360, %v384
      %v389 = vadd.f32 %v379, %v384
      %v390 = vsel %vm305, %v386, -inf
      %391 = vmax.xlane.f32.xlu0 %v390
      %v392 = vpop.xlane.xlu0 %391
      %v393 = vsel %vm305, %v387, -inf
      %394 = vmax.xlane.f32.xlu0 %v393
      %v395 = vpop.xlane.xlu0 %394
      %v396 = vsel %vm305, %v388, -inf
      %397 = vmax.xlane.f32.xlu0 %v396
      %v398 = vpop.xlane.xlu0 %397
      %v399 = vsel %vm305, %v389, -inf
      %400 = vmax.xlane.f32.xlu0 %v399
      %v401 = vpop.xlane.xlu0 %400
      %v402 = vsub.f32 %v386, %v392
      %v403 = vsub.f32 %v387, %v395
      %v404 = vsub.f32 %v388, %v398
      %v405 = vsub.f32 %v389, %v401
      %v406 = vmul.f32 %v402, 1.442695
      %v407 = vpow.pop %v406
      %v408 = vmul.f32 %v403, 1.442695
      %v409 = vpow.pop %v408
      %v410 = vmul.f32 %v404, 1.442695
      %v411 = vpow.pop %v410
      %v412 = vmul.f32 %v405, 1.442695
      %v413 = vpow.pop %v412
      %v414 = vsel %vm305, %v407, 0.0
      %415 = vadd.xlane.f32.xlu0 %v414
      %v416 = vpop.xlane.xlu0 %415
      %v417 = vsel %vm305, %v409, 0.0
      %418 = vadd.xlane.f32.xlu0 %v417
      %v419 = vpop.xlane.xlu0 %418
      %v420 = vsel %vm305, %v411, 0.0
      %421 = vadd.xlane.f32.xlu0 %v420
      %v422 = vpop.xlane.xlu0 %421
      %v423 = vsel %vm305, %v413, 0.0
      %424 = vadd.xlane.f32.xlu0 %v423
      %v425 = vpop.xlane.xlu0 %424
      %v426 = vrcp.pop %v416
      %v427 = vrcp.pop %v419
      %v428 = vrcp.pop %v422
      %v429 = vrcp.pop %v425
      %v430 = vmul.f32 %v407, %v426
      %v431 = vmul.f32 %v409, %v427
      %v432 = vmul.f32 %v411, %v428
      %v433 = vmul.f32 %v413, %v429
      %v434 = vpack.c.bf16 %v430, %v430
      %v435 = vpack.c.bf16 %v431, %v431
      %v436 = vpack.c.bf16 %v432, %v432
      %v437 = vpack.c.bf16 %v433, %v433
      %v439 = vsel %vm305, %v434, 0
      %vm441 = vcmask 1043456
      %v443 = vsel %vm441, %v300, 0
      %445 = vmatpush.bf16.msra.mxu0 0
      %446 = vmatpush.bf16.msra.mxu0 0
      %447 = vmatpush.bf16.msra.mxu0 0
      %448 = vmatpush.bf16.msra.mxu0 0
      %449 = vmatpush.bf16.msra.mxu0 0
      %450 = vmatpush.bf16.msra.mxu0 0
      %451 = vmatpush.bf16.msra.mxu0 0
      %452 = vmatpush.bf16.msra.mxu0 %v443
      %453 = vmatmul.bf16.gmra.mxu0 %v439
      %v454 = vpop.f32.mrf.mxu0
      %v455 = vadd.f32 0.0, %v454
      %v456 = vpop.f32.mrf.mxu0
      %457 = vdwg.mxu0
      %v459 = vsel %vm305, %v435, 0
      %v462 = vsel %vm441, %v301, 0
      %464 = vmatpush.bf16.msra.mxu0 0
      %465 = vmatpush.bf16.msra.mxu0 0
      %466 = vmatpush.bf16.msra.mxu0 0
      %467 = vmatpush.bf16.msra.mxu0 0
      %468 = vmatpush.bf16.msra.mxu0 0
      %469 = vmatpush.bf16.msra.mxu0 0
      %470 = vmatpush.bf16.msra.mxu0 0
      %471 = vmatpush.bf16.msra.mxu0 %v462
      %472 = vmatmul.bf16.gmra.mxu0 %v459
      %v473 = vpop.f32.mrf.mxu0
      %v474 = vadd.f32 0.0, %v473
      %v475 = vpop.f32.mrf.mxu0
      %476 = vdwg.mxu0
      %v478 = vsel %vm305, %v436, 0
      %v481 = vsel %vm441, %v302, 0
      %483 = vmatpush.bf16.msra.mxu0 0
      %484 = vmatpush.bf16.msra.mxu0 0
      %485 = vmatpush.bf16.msra.mxu0 0
      %486 = vmatpush.bf16.msra.mxu0 0
      %487 = vmatpush.bf16.msra.mxu0 0
      %488 = vmatpush.bf16.msra.mxu0 0
      %489 = vmatpush.bf16.msra.mxu0 0
      %490 = vmatpush.bf16.msra.mxu0 %v481
      %491 = vmatmul.bf16.gmra.mxu0 %v478
      %v492 = vpop.f32.mrf.mxu0
      %v493 = vadd.f32 0.0, %v492
      %v494 = vpop.f32.mrf.mxu0
      %495 = vdwg.mxu0
      %v497 = vsel %vm305, %v437, 0
      %v500 = vsel %vm441, %v303, 0
      %502 = vmatpush.bf16.msra.mxu0 0
      %503 = vmatpush.bf16.msra.mxu0 0
      %504 = vmatpush.bf16.msra.mxu0 0
      %505 = vmatpush.bf16.msra.mxu0 0
      %506 = vmatpush.bf16.msra.mxu0 0
      %507 = vmatpush.bf16.msra.mxu0 0
      %508 = vmatpush.bf16.msra.mxu0 0
      %509 = vmatpush.bf16.msra.mxu0 %v500
      %510 = vmatmul.bf16.gmra.mxu0 %v497
      %v511 = vpop.f32.mrf.mxu0
      %v512 = vadd.f32 0.0, %v511
      %v513 = vpop.f32.mrf.mxu0
      %514 = vdwg.mxu0
      %515 = vst.msk [vmem:[%s278] sm:$0xff] %vm305, %v455
      %516 = vst.msk [vmem:[%s278 + $0x8] sm:$0xff] %vm305, %v474
      %517 = vst.msk [vmem:[%s278 + $0x10] sm:$0xff] %vm305, %v493
      %518 = vst.msk [vmem:[%s278 + $0x18] sm:$0xff] %vm305, %v512
      %p519 = scmp.lt.s32.totalorder %s16, 1
      %s520 = scalar_select %p519, %s16, 1
      %s521 = smul.addr %s520, 4
      %s522 = smul.addr %s521, 8
      %s523 = scalar_lea.vmem %s5, %s522
      // Predicated region
      $region41: #{transformer_fwd.36} parent=39 // pred_check
        %p524 = pneg %p159
      $region42: #{transformer_fwd.36} parent=39 // pred_check_branch
        %526 = sbr.rel (%p524) target = $region44
      $region43: #{transformer_fwd.36} parent=39 // pred_region
        _
      $region44: #{transformer_fwd.36} parent=39 // pred_fallthru
        _
    $region40: #{transformer_fwd.36} parent=5 // pred_fallthru
      _
    %p527 = scmp.le.s32.totalorder 2, %s11
    // Predicated region
    $region45: #{transformer_fwd.36} parent=5 // pred_check
      %p528 = pneg %p527
    $region46: #{transformer_fwd.36} parent=5 // pred_check_branch
      %530 = sbr.rel (%p528) target = $region48
    $region47: #{transformer_fwd.36} parent=5 // pred_region
      %s531 = ssub.s32 %s11, 2
      // Predicated region
      $region49: #{transformer_fwd.36} parent=47 // pred_check
        %p532 = pneg %p165
      $region50: #{transformer_fwd.36} parent=47 // pred_check_branch
        %534 = sbr.rel (%p532) target = $region52
      $region51: #{transformer_fwd.36} parent=47 // pred_region
        %p535 = scmp.lt.s32.totalorder %s17, 1
        %s536 = scalar_select %p535, %s17, 1
        %s537 = smul.addr %s536, 4
        %s538 = smul.addr %s537, 8
        %s539 = scalar_lea.vmem %s5, %s538
      $region52: #{transformer_fwd.36} parent=47 // pred_fallthru
        _
    $region48: #{transformer_fwd.36} parent=5 // pred_fallthru
      _
  $region6: #{transformer_fwd.36} parent=0 // loop_footer
    %s15 = sadd.s32 1, %s11
  $region7: #{transformer_fwd.36} parent=0 // loop_footer_branch
    %10 = sbr.rel target = $region3
  $region8: #{transformer_fwd.36} parent=0 // loop_exit
    _

// kernel: transformer_fwd.37
$region0: #{transformer_fwd.37}
  #allocation0 [shape = 'u32[]', space=smem, size = 0x4, offset = 0x4, fixed_abs, tag = 'smem constant byte address 0x4 - core index']
  #allocation1 [shape = 'u32[72,128]{1,0:T(1,128)}', space=vmem, size = 0x9000, scoped, tag = 'internal scratch']
  %s0 = inlined_call_operand.vmem [shape: f32[16,32], index: 0, kind: input, shape index: {}]
  %s1 = inlined_call_operand.vmem [shape: bf16[32,32], index: 1, kind: input, shape index: {}]
  %s2 = inlined_call_operand.vmem [shape: f32[1,32], index: 2, kind: input, shape index: {}]
  %s3 = inlined_call_operand.vmem [shape: f32[16,32], index: 3, kind: input, shape index: {}]
  %s4 = inlined_call_operand.vmem [shape: f32[1,32], index: 4, kind: input, shape index: {}]
  %s5 = inlined_call_operand.vmem [shape: f32[1,32], index: 5, kind: input, shape index: {}]
  %s6 = inlined_call_operand.vmem [shape: f32[16,32], index: 6, kind: output, shape index: {}]
  %s7 = sld [smem:[#allocation0]]
  $region34: #{transformer_fwd.37} parent=0
    _
  %s9 = ssub.s32 1, %s7
  %s10 = scalar_select 0, %s9, %s7
  // Predicated region
  $region2: #{transformer_fwd.37} parent=0 // pred_check
    _
  $region3: #{transformer_fwd.37} parent=0 // pred_check_branch
    %12 = sbr.rel (0) target = $region5
  $region4: #{transformer_fwd.37} parent=0 // pred_region
    _
  $region5: #{transformer_fwd.37} parent=0 // pred_fallthru
    _
  // Predicated region
  $region6: #{transformer_fwd.37} parent=0 // pred_check
    _
  $region7: #{transformer_fwd.37} parent=0 // pred_check_branch
    %14 = sbr.rel (0) target = $region9
  $region8: #{transformer_fwd.37} parent=0 // pred_region
    _
  $region9: #{transformer_fwd.37} parent=0 // pred_fallthru
    _
  // Predicated region
  $region10: #{transformer_fwd.37} parent=0 // pred_check
    _
  $region11: #{transformer_fwd.37} parent=0 // pred_check_branch
    %16 = sbr.rel (0) target = $region13
  $region12: #{transformer_fwd.37} parent=0 // pred_region
    _
  $region13: #{transformer_fwd.37} parent=0 // pred_fallthru
    _
  // Predicated region
  $region14: #{transformer_fwd.37} parent=0 // pred_check
    _
  $region15: #{transformer_fwd.37} parent=0 // pred_check_branch
    %18 = sbr.rel (0) target = $region17
  $region16: #{transformer_fwd.37} parent=0 // pred_region
    _
  $region17: #{transformer_fwd.37} parent=0 // pred_fallthru
    _
  // Predicated region
  $region18: #{transformer_fwd.37} parent=0 // pred_check
    _
  $region19: #{transformer_fwd.37} parent=0 // pred_check_branch
    %20 = sbr.rel (0) target = $region21
  $region20: #{transformer_fwd.37} parent=0 // pred_region
    _
  $region21: #{transformer_fwd.37} parent=0 // pred_fallthru
    _
  // Predicated region
  $region22: #{transformer_fwd.37} parent=0 // pred_check
    _
  $region23: #{transformer_fwd.37} parent=0 // pred_check_branch
    %22 = sbr.rel (0) target = $region25
  $region24: #{transformer_fwd.37} parent=0 // pred_region
    _
  $region25: #{transformer_fwd.37} parent=0 // pred_fallthru
    _
  %v24 = vld [vmem:[%s0] sm:$0xff]
  %v25 = vld [vmem:[%s0 + $0x8] sm:$0xff]
  %v26 = vpack.c.bf16 %v25, %v24
  %v27 = vld [vmem:[%s1] sm:$0xf]
  %v28 = vld [vmem:[%s1 + $0x4] sm:$0xf]
  %v29 = vld [vmem:[%s1 + $0x8] sm:$0xf]
  %v30 = vld [vmem:[%s1 + $0xc] sm:$0xf]
  %v31 = vld [vmem:[%s2] sm:$0x1]
  %v33 = vperm.slane %v31, 0
  %v39 = vunpack.c.l.b16 %v27
  %v40 = vunpack.c.l.b16 %v28
  %v41 = vunpack.c.l.b16 %v29
  %v42 = vunpack.c.l.b16 %v30
  %v43 = vpack.c.b16 %v40, %v39
  %v44 = vpack.c.b16 %v42, %v41
  %vm47 = vcmask 261120
  %v49 = vsel %vm47, %v26, 0
  %51 = vmatpush.bf16.msra.mxu0 0
  %52 = vmatpush.bf16.msra.mxu0 0
  %53 = vmatpush.bf16.msra.mxu0 0
  %54 = vmatpush.bf16.msra.mxu0 0
  %55 = vmatpush.bf16.msra.mxu0 0
  %56 = vmatpush.bf16.msra.mxu0 0
  %57 = vmatpush.bf16.msra.mxu0 %v44
  %58 = vmatpush.bf16.msra.mxu0 %v43
  %59 = vmatmul.bf16.gmra.mxu0 %v49
  %v60 = vpop.f32.mrf.mxu0
  %v61 = vadd.f32 %v33, %v60
  %v62 = vpop.f32.mrf.mxu0
  %v63 = vadd.f32 %v33, %v62
  %64 = vdwg.mxu0
  %v65 = vld [vmem:[%s3] sm:$0xff]
  %v66 = vld [vmem:[%s3 + $0x8] sm:$0xff]
  %v67 = vadd.f32 %v61, %v65
  %v68 = vadd.f32 %v63, %v66
  %v69 = vld [vmem:[%s4] sm:$0x1]
  %v70 = vld [vmem:[%s5] sm:$0x1]
  %v71 = vsel %vm47, %v67, 0.0
  %72 = vadd.xlane.f32.xlu0 %v71
  %v73 = vpop.xlane.xlu0 %72
  %v74 = vsel %vm47, %v68, 0.0
  %75 = vadd.xlane.f32.xlu0 %v74
  %v76 = vpop.xlane.xlu0 %75
  %v77 = vrcp.pop 32.0
  %v78 = vmul.f32 32.0, %v77
  %v79 = vsub.f32 1.0, %v78
  %v80 = vmul.f32 %v77, %v79
  %v81 = vadd.f32 %v77, %v80
  %vm82 = vweird.f32 %v77
  %v83 = vsel %vm82, %v77, %v81
  %v84 = vmul.f32 %v73, %v83
  %v85 = vmul.f32 %v76, %v83
  %v86 = vsub.f32 %v67, %v84
  %v87 = vsub.f32 %v68, %v85
  %v88 = vmul.f32 %v86, %v86
  %v89 = vmul.f32 %v87, %v87
  %v90 = vsel %vm47, %v88, 0.0
  %91 = vadd.xlane.f32.xlu0 %v90
  %v92 = vpop.xlane.xlu0 %91
  %v93 = vsel %vm47, %v89, 0.0
  %94 = vadd.xlane.f32.xlu0 %v93
  %v95 = vpop.xlane.xlu0 %94
  %v96 = vmul.f32 %v92, %v83
  %v97 = vmul.f32 %v95, %v83
  %v98 = vadd.f32 %v96, 1e-05
  %v99 = vadd.f32 %v97, 1e-05
  %v100 = vrsqrt.pop %v98
  %v101 = vmul.f32 %v100, %v98
  %v102 = vmul.f32 %v101, %v100
  %v103 = vmul.f32 0.5, %v102
  %v104 = vsub.f32 1.5, %v103
  %v105 = vmul.f32 %v100, %v104
  %vm106 = vweird.f32 %v98
  %vm107 = vweird.f32 %v100
  %vm108 = vmor %vm106, %vm107
  %v109 = vsel %vm108, %v100, %v105
  %v110 = vrsqrt.pop %v99
  %v111 = vmul.f32 %v110, %v99
  %v112 = vmul.f32 %v111, %v110
  %v113 = vmul.f32 0.5, %v112
  %v114 = vsub.f32 1.5, %v113
  %v115 = vmul.f32 %v110, %v114
  %vm116 = vweird.f32 %v99
  %vm117 = vweird.f32 %v110
  %vm118 = vmor %vm116, %vm117
  %v119 = vsel %vm118, %v110, %v115
  %v120 = vmul.f32 %v86, %v109
  %v121 = vmul.f32 %v87, %v119
  %v123 = vperm.slane %v69, 0
  %v125 = vmul.f32 %v120, %v123
  %v126 = vmul.f32 %v121, %v123
  %v128 = vperm.slane %v70, 0
  %v130 = vadd.f32 %v125, %v128
  %v131 = vadd.f32 %v126, %v128
  %132 = vst.msk [vmem:[%s6] sm:$0xff] %vm47, %v130
  %133 = vst.msk [vmem:[%s6 + $0x8] sm:$0xff] %vm47, %v131
  // Predicated region
  $region26: #{transformer_fwd.37} parent=0 // pred_check
    _
  $region27: #{transformer_fwd.37} parent=0 // pred_check_branch
    %135 = sbr.rel (0) target = $region29
  $region28: #{transformer_fwd.37} parent=0 // pred_region
    _
  $region29: #{transformer_fwd.37} parent=0 // pred_fallthru
    _
  // Predicated region
  $region30: #{transformer_fwd.37} parent=0 // pred_check
    _
  $region31: #{transformer_fwd.37} parent=0 // pred_check_branch
    %137 = sbr.rel (0) target = $region33
  $region32: #{transformer_fwd.37} parent=0 // pred_region
    _
  $region33: #{transformer_fwd.37} parent=0 // pred_fallthru
    _

// kernel: transformer_fwd.38
$region0: #{transformer_fwd.38}
  #allocation0 [shape = 'u32[]', space=smem, size = 0x4, offset = 0x4, fixed_abs, tag = 'smem constant byte address 0x4 - core index']
  #allocation1 [shape = 'u32[72,128]{1,0:T(1,128)}', space=vmem, size = 0x9000, scoped, tag = 'internal scratch']
  %s0 = inlined_call_operand.vmem [shape: f32[16,32], index: 0, kind: input, shape index: {}]
  %s1 = inlined_call_operand.vmem [shape: bf16[32,32], index: 1, kind: input, shape index: {}]
  %s2 = inlined_call_operand.vmem [shape: f32[1,32], index: 2, kind: input, shape index: {}]
  %s3 = inlined_call_operand.vmem [shape: f32[16,32], index: 3, kind: output, shape index: {}]
  %s4 = sld [smem:[#allocation0]]
  $region22: #{transformer_fwd.38} parent=0
    _
  %s6 = ssub.s32 1, %s4
  %s7 = scalar_select 0, %s6, %s4
  // Predicated region
  $region2: #{transformer_fwd.38} parent=0 // pred_check
    _
  $region3: #{transformer_fwd.38} parent=0 // pred_check_branch
    %9 = sbr.rel (0) target = $region5
  $region4: #{transformer_fwd.38} parent=0 // pred_region
    _
  $region5: #{transformer_fwd.38} parent=0 // pred_fallthru
    _
  // Predicated region
  $region6: #{transformer_fwd.38} parent=0 // pred_check
    _
  $region7: #{transformer_fwd.38} parent=0 // pred_check_branch
    %11 = sbr.rel (0) target = $region9
  $region8: #{transformer_fwd.38} parent=0 // pred_region
    _
  $region9: #{transformer_fwd.38} parent=0 // pred_fallthru
    _
  // Predicated region
  $region10: #{transformer_fwd.38} parent=0 // pred_check
    _
  $region11: #{transformer_fwd.38} parent=0 // pred_check_branch
    %13 = sbr.rel (0) target = $region13
  $region12: #{transformer_fwd.38} parent=0 // pred_region
    _
  $region13: #{transformer_fwd.38} parent=0 // pred_fallthru
    _
  %v15 = vld [vmem:[%s0] sm:$0xff]
  %v16 = vld [vmem:[%s0 + $0x8] sm:$0xff]
  %v17 = vpack.c.bf16 %v16, %v15
  %v18 = vld [vmem:[%s1] sm:$0xf]
  %v19 = vld [vmem:[%s1 + $0x4] sm:$0xf]
  %v20 = vld [vmem:[%s1 + $0x8] sm:$0xf]
  %v21 = vld [vmem:[%s1 + $0xc] sm:$0xf]
  %v22 = vld [vmem:[%s2] sm:$0x1]
  %v24 = vperm.slane %v22, 0
  %v30 = vunpack.c.l.b16 %v18
  %v31 = vunpack.c.l.b16 %v19
  %v32 = vunpack.c.l.b16 %v20
  %v33 = vunpack.c.l.b16 %v21
  %v34 = vpack.c.b16 %v31, %v30
  %v35 = vpack.c.b16 %v33, %v32
  %vm38 = vcmask 261120
  %v40 = vsel %vm38, %v17, 0
  %42 = vmatpush.bf16.msra.mxu0 0
  %43 = vmatpush.bf16.msra.mxu0 0
  %44 = vmatpush.bf16.msra.mxu0 0
  %45 = vmatpush.bf16.msra.mxu0 0
  %46 = vmatpush.bf16.msra.mxu0 0
  %47 = vmatpush.bf16.msra.mxu0 0
  %48 = vmatpush.bf16.msra.mxu0 %v35
  %49 = vmatpush.bf16.msra.mxu0 %v34
  %50 = vmatmul.bf16.gmra.mxu0 %v40
  %v51 = vpop.f32.mrf.mxu0
  %v52 = vadd.f32 %v24, %v51
  %v53 = vpop.f32.mrf.mxu0
  %v54 = vadd.f32 %v24, %v53
  %55 = vdwg.mxu0
  %56 = vst.msk [vmem:[%s3] sm:$0xff] %vm38, %v52
  %57 = vst.msk [vmem:[%s3 + $0x8] sm:$0xff] %vm38, %v54
  // Predicated region
  $region14: #{transformer_fwd.38} parent=0 // pred_check
    _
  $region15: #{transformer_fwd.38} parent=0 // pred_check_branch
    %59 = sbr.rel (0) target = $region17
  $region16: #{transformer_fwd.38} parent=0 // pred_region
    _
  $region17: #{transformer_fwd.38} parent=0 // pred_fallthru
    _
  // Predicated region
  $region18: #{transformer_fwd.38} parent=0 // pred_check
    _
  $region19: #{transformer_fwd.38} parent=0 // pred_check_branch
    %61 = sbr.rel (0) target = $region21
  $region20: #{transformer_fwd.38} parent=0 // pred_region
    _
  $region21: #{transformer_fwd.38} parent=0 // pred_fallthru
    _

// kernel: transformer_fwd.39
$region0: #{transformer_fwd.39}
  #allocation0 [shape = 'u32[]', space=smem, size = 0x4, offset = 0x4, fixed_abs, tag = 'smem constant byte address 0x4 - core index']
  #allocation1 [shape = 'u32[72,128]{1,0:T(1,128)}', space=vmem, size = 0x9000, scoped, tag = 'internal scratch']
  %s0 = inlined_call_operand.vmem [shape: f32[16,32], index: 0, kind: input, shape index: {}]
  %s1 = inlined_call_operand.vmem [shape: bf16[32,64], index: 1, kind: input, shape index: {}]
  %s2 = inlined_call_operand.vmem [shape: f32[1,64], index: 2, kind: input, shape index: {}]
  %s3 = inlined_call_operand.vmem [shape: f32[16,64], index: 3, kind: output, shape index: {}]
  %s4 = sld [smem:[#allocation0]]
  $region22: #{transformer_fwd.39} parent=0
    _
  %s6 = ssub.s32 1, %s4
  %s7 = scalar_select 0, %s6, %s4
  // Predicated region
  $region2: #{transformer_fwd.39} parent=0 // pred_check
    _
  $region3: #{transformer_fwd.39} parent=0 // pred_check_branch
    %9 = sbr.rel (0) target = $region5
  $region4: #{transformer_fwd.39} parent=0 // pred_region
    _
  $region5: #{transformer_fwd.39} parent=0 // pred_fallthru
    _
  // Predicated region
  $region6: #{transformer_fwd.39} parent=0 // pred_check
    _
  $region7: #{transformer_fwd.39} parent=0 // pred_check_branch
    %11 = sbr.rel (0) target = $region9
  $region8: #{transformer_fwd.39} parent=0 // pred_region
    _
  $region9: #{transformer_fwd.39} parent=0 // pred_fallthru
    _
  // Predicated region
  $region10: #{transformer_fwd.39} parent=0 // pred_check
    _
  $region11: #{transformer_fwd.39} parent=0 // pred_check_branch
    %13 = sbr.rel (0) target = $region13
  $region12: #{transformer_fwd.39} parent=0 // pred_region
    _
  $region13: #{transformer_fwd.39} parent=0 // pred_fallthru
    _
  %v15 = vld [vmem:[%s0] sm:$0xff]
  %v16 = vld [vmem:[%s0 + $0x8] sm:$0xff]
  %v17 = vpack.c.bf16 %v16, %v15
  %v18 = vld [vmem:[%s1] sm:$0xf]
  %v19 = vld [vmem:[%s1 + $0x4] sm:$0xf]
  %v20 = vld [vmem:[%s1 + $0x8] sm:$0xf]
  %v21 = vld [vmem:[%s1 + $0xc] sm:$0xf]
  %v22 = vld [vmem:[%s2] sm:$0x1]
  %v24 = vperm.slane %v22, 0
  %v30 = vunpack.c.l.b16 %v18
  %v31 = vunpack.c.l.b16 %v19
  %v32 = vunpack.c.l.b16 %v20
  %v33 = vunpack.c.l.b16 %v21
  %v34 = vpack.c.b16 %v31, %v30
  %v35 = vpack.c.b16 %v33, %v32
  %vm38 = vcmask 261120
  %v40 = vsel %vm38, %v17, 0
  %42 = vmatpush.bf16.msra.mxu0 0
  %43 = vmatpush.bf16.msra.mxu0 0
  %44 = vmatpush.bf16.msra.mxu0 0
  %45 = vmatpush.bf16.msra.mxu0 0
  %46 = vmatpush.bf16.msra.mxu0 0
  %47 = vmatpush.bf16.msra.mxu0 0
  %48 = vmatpush.bf16.msra.mxu0 %v35
  %49 = vmatpush.bf16.msra.mxu0 %v34
  %50 = vmatmul.bf16.gmra.mxu0 %v40
  %v51 = vpop.f32.mrf.mxu0
  %v52 = vadd.f32 %v24, %v51
  %v53 = vpop.f32.mrf.mxu0
  %v54 = vadd.f32 %v24, %v53
  %55 = vdwg.mxu0
  %vm56 = vcmask 523264
  %57 = vst.msk [vmem:[%s3] sm:$0xff] %vm56, %v52
  %58 = vst.msk [vmem:[%s3 + $0x8] sm:$0xff] %vm56, %v54
  // Predicated region
  $region14: #{transformer_fwd.39} parent=0 // pred_check
    _
  $region15: #{transformer_fwd.39} parent=0 // pred_check_branch
    %60 = sbr.rel (0) target = $region17
  $region16: #{transformer_fwd.39} parent=0 // pred_region
    _
  $region17: #{transformer_fwd.39} parent=0 // pred_fallthru
    _
  // Predicated region
  $region18: #{transformer_fwd.39} parent=0 // pred_check
    _
  $region19: #{transformer_fwd.39} parent=0 // pred_check_branch
    %62 = sbr.rel (0) target = $region21
  $region20: #{transformer_fwd.39} parent=0 // pred_region
    _
  $region21: #{transformer_fwd.39} parent=0 // pred_fallthru
    _

// kernel: transformer_fwd.34
$region0: #{transformer_fwd.34}
  #allocation0 [shape = 'u32[]', space=smem, size = 0x4, offset = 0x4, fixed_abs, tag = 'smem constant byte address 0x4 - core index']
  #allocation1 [shape = 'u32[72,128]{1,0:T(1,128)}', space=vmem, size = 0x9000, scoped, tag = 'internal scratch']
  %s0 = inlined_call_operand.vmem [shape: f32[16,32], index: 0, kind: input, shape index: {}]
  %s1 = inlined_call_operand.vmem [shape: f32[1,32], index: 1, kind: input, shape index: {}]
  %s2 = inlined_call_operand.vmem [shape: f32[1,32], index: 2, kind: input, shape index: {}]
  %s3 = inlined_call_operand.vmem [shape: f32[16,32], index: 3, kind: output, shape index: {}]
  %s4 = sld [smem:[#allocation0]]
  $region22: #{transformer_fwd.34} parent=0
    _
  %s6 = ssub.s32 1, %s4
  %s7 = scalar_select 0, %s6, %s4
  // Predicated region
  $region2: #{transformer_fwd.34} parent=0 // pred_check
    _
  $region3: #{transformer_fwd.34} parent=0 // pred_check_branch
    %9 = sbr.rel (0) target = $region5
  $region4: #{transformer_fwd.34} parent=0 // pred_region
    _
  $region5: #{transformer_fwd.34} parent=0 // pred_fallthru
    _
  // Predicated region
  $region6: #{transformer_fwd.34} parent=0 // pred_check
    _
  $region7: #{transformer_fwd.34} parent=0 // pred_check_branch
    %11 = sbr.rel (0) target = $region9
  $region8: #{transformer_fwd.34} parent=0 // pred_region
    _
  $region9: #{transformer_fwd.34} parent=0 // pred_fallthru
    _
  // Predicated region
  $region10: #{transformer_fwd.34} parent=0 // pred_check
    _
  $region11: #{transformer_fwd.34} parent=0 // pred_check_branch
    %13 = sbr.rel (0) target = $region13
  $region12: #{transformer_fwd.34} parent=0 // pred_region
    _
  $region13: #{transformer_fwd.34} parent=0 // pred_fallthru
    _
  %v14 = vld [vmem:[%s0] sm:$0xff]
  %v15 = vld [vmem:[%s0 + $0x8] sm:$0xff]
  %v16 = vld [vmem:[%s1] sm:$0x1]
  %v17 = vld [vmem:[%s2] sm:$0x1]
  %vm18 = vcmask 261120
  %v19 = vsel %vm18, %v14, 0.0
  %20 = vadd.xlane.f32.xlu0 %v19
  %v21 = vpop.xlane.xlu0 %20
  %v22 = vsel %vm18, %v15, 0.0
  %23 = vadd.xlane.f32.xlu0 %v22
  %v24 = vpop.xlane.xlu0 %23
  %v25 = vrcp.pop 32.0
  %v26 = vmul.f32 32.0, %v25
  %v27 = vsub.f32 1.0, %v26
  %v28 = vmul.f32 %v25, %v27
  %v29 = vadd.f32 %v25, %v28
  %vm30 = vweird.f32 %v25
  %v31 = vsel %vm30, %v25, %v29
  %v32 = vmul.f32 %v21, %v31
  %v33 = vmul.f32 %v24, %v31
  %v34 = vsub.f32 %v14, %v32
  %v35 = vsub.f32 %v15, %v33
  %v36 = vmul.f32 %v34, %v34
  %v37 = vmul.f32 %v35, %v35
  %v38 = vsel %vm18, %v36, 0.0
  %39 = vadd.xlane.f32.xlu0 %v38
  %v40 = vpop.xlane.xlu0 %39
  %v41 = vsel %vm18, %v37, 0.0
  %42 = vadd.xlane.f32.xlu0 %v41
  %v43 = vpop.xlane.xlu0 %42
  %v44 = vmul.f32 %v40, %v31
  %v45 = vmul.f32 %v43, %v31
  %v46 = vadd.f32 %v44, 1e-05
  %v47 = vadd.f32 %v45, 1e-05
  %v48 = vrsqrt.pop %v46
  %v49 = vmul.f32 %v48, %v46
  %v50 = vmul.f32 %v49, %v48
  %v51 = vmul.f32 0.5, %v50
  %v52 = vsub.f32 1.5, %v51
  %v53 = vmul.f32 %v48, %v52
  %vm54 = vweird.f32 %v46
  %vm55 = vweird.f32 %v48
  %vm56 = vmor %vm54, %vm55
  %v57 = vsel %vm56, %v48, %v53
  %v58 = vrsqrt.pop %v47
  %v59 = vmul.f32 %v58, %v47
  %v60 = vmul.f32 %v59, %v58
  %v61 = vmul.f32 0.5, %v60
  %v62 = vsub.f32 1.5, %v61
  %v63 = vmul.f32 %v58, %v62
  %vm64 = vweird.f32 %v47
  %vm65 = vweird.f32 %v58
  %vm66 = vmor %vm64, %vm65
  %v67 = vsel %vm66, %v58, %v63
  %v68 = vmul.f32 %v34, %v57
  %v69 = vmul.f32 %v35, %v67
  %v71 = vperm.slane %v16, 0
  %v73 = vmul.f32 %v68, %v71
  %v74 = vmul.f32 %v69, %v71
  %v76 = vperm.slane %v17, 0
  %v78 = vadd.f32 %v73, %v76
  %v79 = vadd.f32 %v74, %v76
  %80 = vst.msk [vmem:[%s3] sm:$0xff] %vm18, %v78
  %81 = vst.msk [vmem:[%s3 + $0x8] sm:$0xff] %vm18, %v79
  // Predicated region
  $region14: #{transformer_fwd.34} parent=0 // pred_check
    _
  $region15: #{transformer_fwd.34} parent=0 // pred_check_branch
    %83 = sbr.rel (0) target = $region17
  $region16: #{transformer_fwd.34} parent=0 // pred_region
    _
  $region17: #{transformer_fwd.34} parent=0 // pred_fallthru
    _
  // Predicated region
  $region18: #{transformer_fwd.34} parent=0 // pred_check
    _
  $region19: #{transformer_fwd.34} parent=0 // pred_check_branch
    %85 = sbr.rel (0) target = $region21
  $region20: #{transformer_fwd.34} parent=0 // pred_region
    _
  $region21: #{transformer_fwd.34} parent=0 // pred_fallthru
    _

// kernel: transformer_fwd.29
$region0: #{transformer_fwd.29}
  #allocation0 [shape = 'u32[]', space=smem, size = 0x4, offset = 0x4, fixed_abs, tag = 'smem constant byte address 0x4 - core index']
  #allocation1 [shape = 'u32[72,128]{1,0:T(1,128)}', space=vmem, size = 0x9000, scoped, tag = 'internal scratch']
  %s0 = inlined_call_operand.vmem [shape: f32[16,32], index: 0, kind: input, shape index: {}]
  %s1 = inlined_call_operand.vmem [shape: bf16[32,64], index: 1, kind: input, shape index: {}]
  %s2 = inlined_call_operand.vmem [shape: f32[1,64], index: 2, kind: input, shape index: {}]
  %s3 = inlined_call_operand.vmem [shape: bf16[64,32], index: 3, kind: input, shape index: {}]
  %s4 = inlined_call_operand.vmem [shape: f32[1,32], index: 4, kind: input, shape index: {}]
  %s5 = inlined_call_operand.vmem [shape: f32[1,32], index: 5, kind: input, shape index: {}]
  %s6 = inlined_call_operand.vmem [shape: f32[1,32], index: 6, kind: input, shape index: {}]
  %s7 = inlined_call_operand.vmem [shape: f32[16,32], index: 7, kind: output, shape index: {}]
  %s8 = sld [smem:[#allocation0]]
  $region38: #{transformer_fwd.29} parent=0
    _
  %s10 = ssub.s32 1, %s8
  %s11 = scalar_select 0, %s10, %s8
  // Predicated region
  $region2: #{transformer_fwd.29} parent=0 // pred_check
    _
  $region3: #{transformer_fwd.29} parent=0 // pred_check_branch
    %13 = sbr.rel (0) target = $region5
  $region4: #{transformer_fwd.29} parent=0 // pred_region
    _
  $region5: #{transformer_fwd.29} parent=0 // pred_fallthru
    _
  // Predicated region
  $region6: #{transformer_fwd.29} parent=0 // pred_check
    _
  $region7: #{transformer_fwd.29} parent=0 // pred_check_branch
    %15 = sbr.rel (0) target = $region9
  $region8: #{transformer_fwd.29} parent=0 // pred_region
    _
  $region9: #{transformer_fwd.29} parent=0 // pred_fallthru
    _
  // Predicated region
  $region10: #{transformer_fwd.29} parent=0 // pred_check
    _
  $region11: #{transformer_fwd.29} parent=0 // pred_check_branch
    %17 = sbr.rel (0) target = $region13
  $region12: #{transformer_fwd.29} parent=0 // pred_region
    _
  $region13: #{transformer_fwd.29} parent=0 // pred_fallthru
    _
  // Predicated region
  $region14: #{transformer_fwd.29} parent=0 // pred_check
    _
  $region15: #{transformer_fwd.29} parent=0 // pred_check_branch
    %19 = sbr.rel (0) target = $region17
  $region16: #{transformer_fwd.29} parent=0 // pred_region
    _
  $region17: #{transformer_fwd.29} parent=0 // pred_fallthru
    _
  // Predicated region
  $region18: #{transformer_fwd.29} parent=0 // pred_check
    _
  $region19: #{transformer_fwd.29} parent=0 // pred_check_branch
    %21 = sbr.rel (0) target = $region21
  $region20: #{transformer_fwd.29} parent=0 // pred_region
    _
  $region21: #{transformer_fwd.29} parent=0 // pred_fallthru
    _
  // Predicated region
  $region22: #{transformer_fwd.29} parent=0 // pred_check
    _
  $region23: #{transformer_fwd.29} parent=0 // pred_check_branch
    %23 = sbr.rel (0) target = $region25
  $region24: #{transformer_fwd.29} parent=0 // pred_region
    _
  $region25: #{transformer_fwd.29} parent=0 // pred_fallthru
    _
  // Predicated region
  $region26: #{transformer_fwd.29} parent=0 // pred_check
    _
  $region27: #{transformer_fwd.29} parent=0 // pred_check_branch
    %25 = sbr.rel (0) target = $region29
  $region28: #{transformer_fwd.29} parent=0 // pred_region
    _
  $region29: #{transformer_fwd.29} parent=0 // pred_fallthru
    _
  %v27 = vld [vmem:[%s0] sm:$0xff]
  %v28 = vld [vmem:[%s0 + $0x8] sm:$0xff]
  %v29 = vpack.c.bf16 %v28, %v27
  %v30 = vld [vmem:[%s1] sm:$0xf]
  %v31 = vld [vmem:[%s1 + $0x4] sm:$0xf]
  %v32 = vld [vmem:[%s1 + $0x8] sm:$0xf]
  %v33 = vld [vmem:[%s1 + $0xc] sm:$0xf]
  %v34 = vld [vmem:[%s2] sm:$0x1]
  %v36 = vperm.slane %v34, 0
  %v42 = vunpack.c.l.b16 %v30
  %v43 = vunpack.c.l.b16 %v31
  %v44 = vunpack.c.l.b16 %v32
  %v45 = vunpack.c.l.b16 %v33
  %v46 = vpack.c.b16 %v43, %v42
  %v47 = vpack.c.b16 %v45, %v44
  %vm50 = vcmask 261120
  %v52 = vsel %vm50, %v29, 0
  %54 = vmatpush.bf16.msra.mxu0 0
  %55 = vmatpush.bf16.msra.mxu0 0
  %56 = vmatpush.bf16.msra.mxu0 0
  %57 = vmatpush.bf16.msra.mxu0 0
  %58 = vmatpush.bf16.msra.mxu0 0
  %59 = vmatpush.bf16.msra.mxu0 0
  %60 = vmatpush.bf16.msra.mxu0 %v47
  %61 = vmatpush.bf16.msra.mxu0 %v46
  %62 = vmatmul.bf16.gmra.mxu0 %v52
  %v63 = vpop.f32.mrf.mxu0
  %v64 = vadd.f32 %v36, %v63
  %v65 = vpop.f32.mrf.mxu0
  %v66 = vadd.f32 %v36, %v65
  %67 = vdwg.mxu0
  %v68 = vmax.f32 %v64, 0.0
  %v69 = vmax.f32 %v66, 0.0
  %v70 = vpack.c.bf16 %v69, %v68
  %v71 = vld [vmem:[%s3] sm:$0xf]
  %v72 = vld [vmem:[%s3 + $0x4] sm:$0xf]
  %v73 = vld [vmem:[%s3 + $0x8] sm:$0xf]
  %v74 = vld [vmem:[%s3 + $0xc] sm:$0xf]
  %v75 = vld [vmem:[%s3 + $0x10] sm:$0xf]
  %v76 = vld [vmem:[%s3 + $0x14] sm:$0xf]
  %v77 = vld [vmem:[%s3 + $0x18] sm:$0xf]
  %v78 = vld [vmem:[%s3 + $0x1c] sm:$0xf]
  %v79 = vld [vmem:[%s4] sm:$0x1]
  %v81 = vperm.slane %v79, 0
  %v91 = vunpack.c.l.b16 %v71
  %v92 = vunpack.c.l.b16 %v72
  %v93 = vunpack.c.l.b16 %v73
  %v94 = vunpack.c.l.b16 %v74
  %v95 = vunpack.c.l.b16 %v75
  %v96 = vunpack.c.l.b16 %v76
  %v97 = vunpack.c.l.b16 %v77
  %v98 = vunpack.c.l.b16 %v78
  %v99 = vpack.c.b16 %v92, %v91
  %v100 = vpack.c.b16 %v94, %v93
  %v101 = vpack.c.b16 %v96, %v95
  %v102 = vpack.c.b16 %v98, %v97
  %vm107 = vcmask 523264
  %v109 = vsel %vm107, %v70, 0
  %111 = vmatpush.bf16.msra.mxu0 0
  %112 = vmatpush.bf16.msra.mxu0 0
  %113 = vmatpush.bf16.msra.mxu0 0
  %114 = vmatpush.bf16.msra.mxu0 0
  %115 = vmatpush.bf16.msra.mxu0 %v102
  %116 = vmatpush.bf16.msra.mxu0 %v101
  %117 = vmatpush.bf16.msra.mxu0 %v100
  %118 = vmatpush.bf16.msra.mxu0 %v99
  %119 = vmatmul.bf16.gmra.mxu0 %v109
  %v120 = vpop.f32.mrf.mxu0
  %v121 = vadd.f32 %v81, %v120
  %v122 = vpop.f32.mrf.mxu0
  %v123 = vadd.f32 %v81, %v122
  %124 = vdwg.mxu0
  %v125 = vadd.f32 %v121, %v27
  %v126 = vadd.f32 %v123, %v28
  %v127 = vld [vmem:[%s5] sm:$0x1]
  %v128 = vld [vmem:[%s6] sm:$0x1]
  %v129 = vsel %vm50, %v125, 0.0
  %130 = vadd.xlane.f32.xlu0 %v129
  %v131 = vpop.xlane.xlu0 %130
  %v132 = vsel %vm50, %v126, 0.0
  %133 = vadd.xlane.f32.xlu0 %v132
  %v134 = vpop.xlane.xlu0 %133
  %v135 = vrcp.pop 32.0
  %v136 = vmul.f32 32.0, %v135
  %v137 = vsub.f32 1.0, %v136
  %v138 = vmul.f32 %v135, %v137
  %v139 = vadd.f32 %v135, %v138
  %vm140 = vweird.f32 %v135
  %v141 = vsel %vm140, %v135, %v139
  %v142 = vmul.f32 %v131, %v141
  %v143 = vmul.f32 %v134, %v141
  %v144 = vsub.f32 %v125, %v142
  %v145 = vsub.f32 %v126, %v143
  %v146 = vmul.f32 %v144, %v144
  %v147 = vmul.f32 %v145, %v145
  %v148 = vsel %vm50, %v146, 0.0
  %149 = vadd.xlane.f32.xlu0 %v148
  %v150 = vpop.xlane.xlu0 %149
  %v151 = vsel %vm50, %v147, 0.0
  %152 = vadd.xlane.f32.xlu0 %v151
  %v153 = vpop.xlane.xlu0 %152
  %v154 = vmul.f32 %v150, %v141
  %v155 = vmul.f32 %v153, %v141
  %v156 = vadd.f32 %v154, 1e-05
  %v157 = vadd.f32 %v155, 1e-05
  %v158 = vrsqrt.pop %v156
  %v159 = vmul.f32 %v158, %v156
  %v160 = vmul.f32 %v159, %v158
  %v161 = vmul.f32 0.5, %v160
  %v162 = vsub.f32 1.5, %v161
  %v163 = vmul.f32 %v158, %v162
  %vm164 = vweird.f32 %v156
  %vm165 = vweird.f32 %v158
  %vm166 = vmor %vm164, %vm165
  %v167 = vsel %vm166, %v158, %v163
  %v168 = vrsqrt.pop %v157
  %v169 = vmul.f32 %v168, %v157
  %v170 = vmul.f32 %v169, %v168
  %v171 = vmul.f32 0.5, %v170
  %v172 = vsub.f32 1.5, %v171
  %v173 = vmul.f32 %v168, %v172
  %vm174 = vweird.f32 %v157
  %vm175 = vweird.f32 %v168
  %vm176 = vmor %vm174, %vm175
  %v177 = vsel %vm176, %v168, %v173
  %v178 = vmul.f32 %v144, %v167
  %v179 = vmul.f32 %v145, %v177
  %v181 = vperm.slane %v127, 0
  %v183 = vmul.f32 %v178, %v181
  %v184 = vmul.f32 %v179, %v181
  %v186 = vperm.slane %v128, 0
  %v188 = vadd.f32 %v183, %v186
  %v189 = vadd.f32 %v184, %v186
  %190 = vst.msk [vmem:[%s7] sm:$0xff] %vm50, %v188
  %191 = vst.msk [vmem:[%s7 + $0x8] sm:$0xff] %vm50, %v189
  // Predicated region
  $region30: #{transformer_fwd.29} parent=0 // pred_check
    _
  $region31: #{transformer_fwd.29} parent=0 // pred_check_branch
    %193 = sbr.rel (0) target = $region33
  $region32: #{transformer_fwd.29} parent=0 // pred_region
    _
  $region33: #{transformer_fwd.29} parent=0 // pred_fallthru
    _
  // Predicated region
  $region34: #{transformer_fwd.29} parent=0 // pred_check
    _
  $region35: #{transformer_fwd.29} parent=0 // pred_check_branch
    %195 = sbr.rel (0) target = $region37
  $region36: #{transformer_fwd.29} parent=0 // pred_region
    _
  $region37: #{transformer_fwd.29} parent=0 // pred_fallthru
    _

// kernel: transformer_fwd.51
$region0: #{transformer_fwd.51}
  #allocation0 [shape = 'u32[]', space=smem, size = 0x4, offset = 0x4, fixed_abs, tag = 'smem constant byte address 0x4 - core index']
  #allocation1 [shape = 'u32[72,128]{1,0:T(1,128)}', space=vmem, size = 0x9000, scoped, tag = 'internal scratch']
  %s0 = inlined_call_operand.vmem [shape: f32[16,32], index: 0, kind: input, shape index: {}]
  %s1 = inlined_call_operand.vmem [shape: f32[1,32], index: 1, kind: input, shape index: {}]
  %s2 = inlined_call_operand.vmem [shape: f32[1,32], index: 2, kind: input, shape index: {}]
  %s3 = inlined_call_operand.hbm [shape: f32[16,32], index: 3, kind: output, shape index: {}]
  %s4 = sld [smem:[#allocation0]]
  $region22: #{transformer_fwd.51} parent=0
    _
  %s6 = ssub.s32 1, %s4
  %s7 = scalar_select 0, %s6, %s4
  $region1: #{transformer_fwd.51} parent=0
    #allocation2 [shape = 'u8[8192]{0}', space=vmem, size = 0x2000, scoped, tag = 'output window, operand 0, single buffered']
    #allocation3 [shape = 's32[1]{0}', space=sflag, size = 0x4, scoped, tag = 'scoped memory for transformer_fwd.51']
    %8 = vsyncpa [#allocation3], 0
    // Predicated region
    $region2: #{transformer_fwd.51} parent=1 // pred_check
      _
    $region3: #{transformer_fwd.51} parent=1 // pred_check_branch
      %10 = sbr.rel (0) target = $region5
    $region4: #{transformer_fwd.51} parent=1 // pred_region
      _
    $region5: #{transformer_fwd.51} parent=1 // pred_fallthru
      _
    // Predicated region
    $region6: #{transformer_fwd.51} parent=1 // pred_check
      _
    $region7: #{transformer_fwd.51} parent=1 // pred_check_branch
      %12 = sbr.rel (0) target = $region9
    $region8: #{transformer_fwd.51} parent=1 // pred_region
      _
    $region9: #{transformer_fwd.51} parent=1 // pred_fallthru
      _
    // Predicated region
    $region10: #{transformer_fwd.51} parent=1 // pred_check
      _
    $region11: #{transformer_fwd.51} parent=1 // pred_check_branch
      %14 = sbr.rel (0) target = $region13
    $region12: #{transformer_fwd.51} parent=1 // pred_region
      _
    $region13: #{transformer_fwd.51} parent=1 // pred_fallthru
      _
    %v15 = vld [vmem:[%s0] sm:$0xff]
    %v16 = vld [vmem:[%s0 + $0x8] sm:$0xff]
    %v17 = vld [vmem:[%s1] sm:$0x1]
    %v18 = vld [vmem:[%s2] sm:$0x1]
    %vm19 = vcmask 261120
    %v20 = vsel %vm19, %v15, 0.0
    %21 = vadd.xlane.f32.xlu0 %v20
    %v22 = vpop.xlane.xlu0 %21
    %v23 = vsel %vm19, %v16, 0.0
    %24 = vadd.xlane.f32.xlu0 %v23
    %v25 = vpop.xlane.xlu0 %24
    %v26 = vrcp.pop 32.0
    %v27 = vmul.f32 32.0, %v26
    %v28 = vsub.f32 1.0, %v27
    %v29 = vmul.f32 %v26, %v28
    %v30 = vadd.f32 %v26, %v29
    %vm31 = vweird.f32 %v26
    %v32 = vsel %vm31, %v26, %v30
    %v33 = vmul.f32 %v22, %v32
    %v34 = vmul.f32 %v25, %v32
    %v35 = vsub.f32 %v15, %v33
    %v36 = vsub.f32 %v16, %v34
    %v37 = vmul.f32 %v35, %v35
    %v38 = vmul.f32 %v36, %v36
    %v39 = vsel %vm19, %v37, 0.0
    %40 = vadd.xlane.f32.xlu0 %v39
    %v41 = vpop.xlane.xlu0 %40
    %v42 = vsel %vm19, %v38, 0.0
    %43 = vadd.xlane.f32.xlu0 %v42
    %v44 = vpop.xlane.xlu0 %43
    %v45 = vmul.f32 %v41, %v32
    %v46 = vmul.f32 %v44, %v32
    %v47 = vadd.f32 %v45, 1e-05
    %v48 = vadd.f32 %v46, 1e-05
    %v49 = vrsqrt.pop %v47
    %v50 = vmul.f32 %v49, %v47
    %v51 = vmul.f32 %v50, %v49
    %v52 = vmul.f32 0.5, %v51
    %v53 = vsub.f32 1.5, %v52
    %v54 = vmul.f32 %v49, %v53
    %vm55 = vweird.f32 %v47
    %vm56 = vweird.f32 %v49
    %vm57 = vmor %vm55, %vm56
    %v58 = vsel %vm57, %v49, %v54
    %v59 = vrsqrt.pop %v48
    %v60 = vmul.f32 %v59, %v48
    %v61 = vmul.f32 %v60, %v59
    %v62 = vmul.f32 0.5, %v61
    %v63 = vsub.f32 1.5, %v62
    %v64 = vmul.f32 %v59, %v63
    %vm65 = vweird.f32 %v48
    %vm66 = vweird.f32 %v59
    %vm67 = vmor %vm65, %vm66
    %v68 = vsel %vm67, %v59, %v64
    %v69 = vmul.f32 %v35, %v58
    %v70 = vmul.f32 %v36, %v68
    %v72 = vperm.slane %v17, 0
    %v74 = vmul.f32 %v69, %v72
    %v75 = vmul.f32 %v70, %v72
    %v77 = vperm.slane %v18, 0
    %v79 = vadd.f32 %v74, %v77
    %v80 = vadd.f32 %v75, %v77
    %81 = vst.msk [vmem:[#allocation2] sm:$0xff] %vm19, %v79
    %82 = vst.msk [vmem:[#allocation2 + $0x8] sm:$0xff] %vm19, %v80
    // Predicated region
    $region14: #{transformer_fwd.51} parent=1 // pred_check
      _
    $region15: #{transformer_fwd.51} parent=1 // pred_check_branch
      %84 = sbr.rel (0) target = $region17
    $region16: #{transformer_fwd.51} parent=1 // pred_region
      %86 = vsyncadd [#allocation3], 0
      %s87 = sshll.u32 [#allocation2], 4
      %s88 = int_to_ptr.vmem [resolvable:$true] %s87
      %s89 = sshll.u32 %s3, 4
      %s90 = int_to_ptr.hbm [resolvable:$true] %s89
      %95 = dma.vmem_to_hbm [thread:$0]  %s88, 256, %s90, [#allocation3], 128, 128, 8
    $region17: #{transformer_fwd.51} parent=1 // pred_fallthru
      _
    // Predicated region
    $region18: #{transformer_fwd.51} parent=1 // pred_check
      _
    $region19: #{transformer_fwd.51} parent=1 // pred_check_branch
      %97 = sbr.rel (0) target = $region21
    $region20: #{transformer_fwd.51} parent=1 // pred_region
      %99 = dma.done [#allocation3], 256
    $region21: #{transformer_fwd.51} parent=1 // pred_fallthru
      _
    %100 = vsyncpa [#allocation3], 1

</llo_original>
